<compile_context>
chip_gen: v6e
topology: v6e:2x2x1
jax: 0.10.0
libtpu: 0.0.40
codegen_flags: <defaults>
</compile_context>

<pallas_src>
import functools

import numpy as np
import jax
import jax.numpy as jnp
from jax.experimental import pallas as pl
from jax.experimental.pallas import tpu as pltpu

VMEM = pltpu.MemorySpace.VMEM


# ---------------------------------------------------------------------------
# Pallas kernels
# ---------------------------------------------------------------------------
def _matmul_bias_relu_kernel(x_ref, w_ref, b_ref, o_ref):
    y = jnp.dot(x_ref[...], w_ref[...], preferred_element_type=jnp.float32)
    y = jnp.maximum(y + b_ref[...], 0.0)
    o_ref[...] = y.astype(o_ref.dtype)


def matmul_bias_relu(x, w, b, *, tm=512, out_dtype=jnp.float32):
    """ReLU((M,K) @ (K,N) + b).  x/w are bf16 MXU operands, f32 accumulation.

    Grid over M only ("parallel"); the (K,N) weight and (1,N) bias blocks use a
    constant index_map so they stay resident in VMEM across the grid.
    """
    M, K = x.shape
    N = w.shape[1]
    mp = -(-M // 8) * 8                       # sublane-align M
    tm_eff = min(tm, mp)
    mp = -(-mp // tm_eff) * tm_eff            # whole number of M tiles
    if mp != M:
        x = jnp.pad(x, ((0, mp - M), (0, 0)))
    out = pl.pallas_call(
        _matmul_bias_relu_kernel,
        out_shape=jax.ShapeDtypeStruct((mp, N), out_dtype),
        grid=(mp // tm_eff,),
        in_specs=[
            pl.BlockSpec((tm_eff, K), lambda i: (i, 0)),
            pl.BlockSpec((K, N), lambda i: (0, 0)),
            pl.BlockSpec((1, N), lambda i: (0, 0)),
        ],
        out_specs=pl.BlockSpec((tm_eff, N), lambda i: (i, 0)),
        compiler_params=pltpu.CompilerParams(dimension_semantics=("parallel",)),
    )(x, w, b.reshape(1, N))
    return out[:M] if mp != M else out


def _trunk_kernel(x_ref, h_ref, m_ref, w1_ref, b1_ref, wih_ref, whh_ref,
                  bih_ref, bhh_ref, wh_ref, bh_ref, hout_ref, slab_ref,
                  *, hidden, num_actions):
    # linear1 + ReLU
    a = jnp.dot(x_ref[...].astype(jnp.float32), w1_ref[...],
                preferred_element_type=jnp.float32)
    a = jnp.maximum(a + b1_ref[...], 0.0)

    # PyTorch GRUCell (gate order r, z, n); gates fused into two (H,3H) matmuls.
    h = h_ref[...] * m_ref[...]
    gi = jnp.dot(a, wih_ref[...], preferred_element_type=jnp.float32) + bih_ref[...]
    gh = jnp.dot(h, whh_ref[...], preferred_element_type=jnp.float32) + bhh_ref[...]
    r = jax.nn.sigmoid(gi[:, :hidden] + gh[:, :hidden])
    z = jax.nn.sigmoid(gi[:, hidden:2 * hidden] + gh[:, hidden:2 * hidden])
    n = jnp.tanh(gi[:, 2 * hidden:] + r * gh[:, 2 * hidden:])
    hn = (1.0 - z) * n + z * h
    hout_ref[...] = hn

    # Fused critic + policy head: one lane-dense matmul into 128 columns.
    # Column layout of `head`: [0, A) = dist logits, A = critic value, rest 0.
    head = jnp.dot(hn, wh_ref[...], preferred_element_type=jnp.float32) + bh_ref[...]
    col = jax.lax.broadcasted_iota(jnp.int32, head.shape, 1)
    is_logit = col < num_actions
    is_value = col == num_actions
    is_ent = col == num_actions + 1
    mx = jnp.max(jnp.where(is_logit, head, -jnp.inf), axis=1, keepdims=True)
    e = jnp.where(is_logit, jnp.exp(head - mx), 0.0)
    s = jnp.sum(e, axis=1, keepdims=True)
    lse = mx + jnp.log(s)
    lp_full = head - lse                                     # log_softmax on logit cols
    inv_s = pl.reciprocal(s, approx=True)                    # EUP slot, ~free
    ent = -jnp.sum(jnp.where(is_logit, e * lp_full, 0.0), axis=1, keepdims=True) * inv_s
    # Single unmasked (B,128) store: [0,A) log_probs, A value, A+1 entropy.
    slab = jnp.where(is_logit, lp_full, 0.0)
    slab = slab + jnp.where(is_value, head, 0.0)
    slab = slab + jnp.where(is_ent, ent, 0.0)
    slab_ref[...] = slab


def trunk(x, states, masks, p, *, hidden, num_actions):
    B = x.shape[0]
    P = p["head_wT"].shape[1]
    kern = functools.partial(_trunk_kernel, hidden=hidden, num_actions=num_actions)
    return pl.pallas_call(
        kern,
        out_shape=(jax.ShapeDtypeStruct((B, hidden), jnp.float32),
                   jax.ShapeDtypeStruct((B, P), jnp.float32)),
        in_specs=[pl.BlockSpec(memory_space=VMEM)] * 11,
        out_specs=(pl.BlockSpec(memory_space=VMEM),
                   pl.BlockSpec(memory_space=VMEM)),
    )(x, states, masks,
      p["lin1_wT"], p["lin1_b"],
      p["gru_wih_t"], p["gru_whh_t"], p["gru_bih"], p["gru_bhh"],
      p["head_wT"], p["head_b"])


# ---------------------------------------------------------------------------
# Glue: NHWC im2col, conv wrapper, parameter init
# ---------------------------------------------------------------------------
def im2col_nhwc(x, k, stride):
    B, H, W, C = x.shape
    OH = (H - k) // stride + 1
    OW = (W - k) // stride + 1
    cols = []
    for kh in range(k):
        for kw in range(k):
            cols.append(x[:, kh:kh + stride * (OH - 1) + 1:stride,
                          kw:kw + stride * (OW - 1) + 1:stride, :])   # (B,OH,OW,C)
    cols = jnp.stack(cols, axis=0).reshape(k, k, B, OH, OW, C)
    cols = cols.transpose(2, 3, 4, 5, 0, 1)                           # (B,OH,OW,C,kh,kw)
    return cols.reshape(B * OH * OW, C * k * k), OH, OW               # feature order (c,kh,kw)


def conv2d_relu_nhwc(x, w_mat, b, k, stride, out_dtype=jnp.float32):
    # TODO(synk): for rollout-scale batches, move the k=8/stride=4 im2col into
    # the kernel (strided VMEM reads / manual DMA gather) to avoid the 4x patch
    # duplication in HBM.
    B = x.shape[0]
    out_c = w_mat.shape[1]
    patches, OH, OW = im2col_nhwc(x, k, stride)
    y = matmul_bias_relu(patches.astype(jnp.bfloat16), w_mat, b, out_dtype=out_dtype)
    return y.reshape(B, OH, OW, out_c)


def orthogonal(key, rows, cols, gain=1.0):
    big, small = max(rows, cols), min(rows, cols)
    a = jax.random.normal(key, (big, small), dtype=jnp.float32)
    q, r = jnp.linalg.qr(a)
    q = q * jnp.sign(jnp.diagonal(r))[None, :]
    if rows < cols:
        q = q.T
    return (gain * q).astype(jnp.float32)


def init_params(key, input_shape, conv1, conv2, conv3, hidden, num_actions,
                head_pad=128):
    relu_gain = float(np.sqrt(2.0))            # nn.init.calculate_gain('relu')
    C, H, W = input_shape
    o1 = (H - 8) // 4 + 1
    o2 = (o1 - 4) // 2 + 1
    o3 = o2 - 3 + 1
    conv_out = conv3 * o3 * o3
    assert num_actions + 2 <= head_pad

    ks = jax.random.split(key, 8)
    p = {}
    # Conv weights stored as (K, outC) matmul operands in bf16 (MXU inputs).
    # The 1/255 obs scaling is folded into conv1's weight (bias stays unscaled).
    w1 = orthogonal(ks[0], conv1, C * 8 * 8) * relu_gain
    p["conv1_wm"] = (w1 * (1.0 / 255.0)).T.astype(jnp.bfloat16)
    p["conv1_b"] = jnp.zeros((conv1,), jnp.float32)
    w2 = orthogonal(ks[1], conv2, conv1 * 4 * 4) * relu_gain
    p["conv2_wm"] = w2.T.astype(jnp.bfloat16)
    p["conv2_b"] = jnp.zeros((conv2,), jnp.float32)
    w3 = orthogonal(ks[2], conv3, conv2 * 3 * 3) * relu_gain
    p["conv3_wm"] = w3.T.astype(jnp.bfloat16)
    p["conv3_b"] = jnp.zeros((conv3,), jnp.float32)

    # linear1: permute columns from torch's NCHW flatten to our NHWC flatten.
    l1 = orthogonal(ks[3], hidden, conv_out) * relu_gain               # NCHW-ordered columns
    l1 = l1.reshape(hidden, conv3, o3, o3).transpose(0, 2, 3, 1).reshape(hidden, conv_out)
    p["lin1_wT"] = l1.T                                                # (conv_out, hidden)
    p["lin1_b"] = jnp.zeros((1, hidden), jnp.float32)

    # GRUCell weights, gate order (r,z,n) concatenated along the output axis.
    p["gru_wih_t"] = orthogonal(ks[4], 3 * hidden, hidden).T           # (H, 3H)
    p["gru_whh_t"] = orthogonal(ks[5], 3 * hidden, hidden).T           # (H, 3H)
    p["gru_bih"] = jnp.zeros((1, 3 * hidden), jnp.float32)
    p["gru_bhh"] = jnp.zeros((1, 3 * hidden), jnp.float32)

    # Fused heads, lane-padded to 128: cols [0,A) = dist logits, col A = critic.
    wc = orthogonal(ks[6], 1, hidden)                                  # (1, H)
    wd = orthogonal(ks[7], num_actions, hidden)                        # (A, H)
    wh = jnp.zeros((hidden, head_pad), jnp.float32)
    wh = wh.at[:, :num_actions].set(wd.T).at[:, num_actions].set(wc[0])
    p["head_wT"] = wh
    p["head_b"] = jnp.zeros((1, head_pad), jnp.float32)

    cfg = dict(hidden=hidden, num_actions=num_actions, conv_out=conv_out)
    return p, cfg


def make_forward(cfg):
    hidden = cfg["hidden"]
    num_actions = cfg["num_actions"]
    conv_out = cfg["conv_out"]

    @jax.jit
    def forward(params, obs, states, masks, sample_key):
        B = obs.shape[0]
        # Single NCHW -> NHWC transpose at the module boundary; convs stay NHWC.
        x = jnp.transpose(obs.astype(jnp.float32), (0, 2, 3, 1))
        # conv1/conv2 emit bf16 (next layer's MXU operand); conv3 emits f32 for
        # the linear trunk.
        x = conv2d_relu_nhwc(x, params["conv1_wm"], params["conv1_b"], 8, 4,
                             out_dtype=jnp.bfloat16)
        x = conv2d_relu_nhwc(x, params["conv2_wm"], params["conv2_b"], 4, 2,
                             out_dtype=jnp.bfloat16)
        x = conv2d_relu_nhwc(x, params["conv3_wm"], params["conv3_b"], 3, 1,
                             out_dtype=jnp.float32)
        x = x.reshape(B, conv_out)          # NHWC flatten (lin1_wT permuted to match torch view)
        new_states, slab = trunk(x, states, masks, params,
                                 hidden=hidden, num_actions=num_actions)
        log_probs = slab[:, :num_actions]
        values = slab[:, num_actions:num_actions + 1]
        entropy = slab[:, num_actions + 1]
        # Categorical(logits=log_probs) sampling (training mode) in JAX glue.
        actions = jax.random.categorical(sample_key, log_probs, axis=1)
        action_log_probs = jnp.take_along_axis(log_probs, actions[:, None], axis=1)[:, 0]
        return {
            "states": new_states,
            "actions": actions,
            "action_log_probs": action_log_probs,
            "entropy": entropy,
            "values": values,
        }

    return forward


if __name__ == "__main__":
    key = jax.random.PRNGKey(0)
    k_param, k_obs, k_state, k_sample = jax.random.split(key, 4)

    # small shapes: input_shape=(3, 36, 36) -> conv out 8x8 -> 3x3 -> 1x1
    B = 2
    input_shape = (3, 36, 36)
    conv1_size, conv2_size, conv3_size = 8, 8, 16
    hidden_size, num_actions = 32, 6

    params, cfg = init_params(k_param, input_shape, conv1_size, conv2_size,
                              conv3_size, hidden_size, num_actions)
    forward = make_forward(cfg)

    obs = jax.random.uniform(k_obs, (B,) + input_shape, minval=0.0, maxval=255.0,
                             dtype=jnp.float32)
    states = jax.random.normal(k_state, (B, hidden_size), dtype=jnp.float32)
    masks = jnp.ones((B, 1), dtype=jnp.float32)

    out = forward(params, obs, states, masks, k_sample)
    out = jax.block_until_ready(out)

    assert out["states"].shape == (B, hidden_size)
    assert out["values"].shape == (B, 1)
    assert out["actions"].shape == (B,)
    assert out["action_log_probs"].shape == (B,)
    assert out["entropy"].shape == (B,)
    assert bool(jnp.all(jnp.isfinite(out["states"])))
    assert bool(jnp.all(jnp.isfinite(out["values"])))
    assert bool(jnp.all(jnp.isfinite(out["action_log_probs"])))
    assert bool(jnp.all(jnp.isfinite(out["entropy"])))
    print("KERNEL_OK")
</pallas_src>

<mosaic_0001>
module attributes {stable_mosaic.version = 11 : i64} {
  func.func @_matmul_bias_relu_kernel(%arg0: i32, %arg1: memref<128x192xbf16, #tpu.memory_space<vmem>>, %arg2: memref<192x8xbf16, #tpu.memory_space<vmem>>, %arg3: memref<1x8xf32, #tpu.memory_space<vmem>>, %arg4: memref<128x8xbf16, #tpu.memory_space<vmem>>) attributes {dimension_semantics = [#tpu.dimension_semantics<parallel>], iteration_bounds = array<i64: 1>, scalar_prefetch = 0 : i64, scratch_operands = 0 : i64, tpu.core_type = #tpu.core_type<tc>, window_params = [{transform_indices = @transform_0, window_bounds = array<i64: 128, 192>}, {pipeline_mode = #tpu.pipeline_mode<synchronous>, transform_indices = @transform_1, window_bounds = array<i64: 192, 8>}, {pipeline_mode = #tpu.pipeline_mode<synchronous>, transform_indices = @transform_2, window_bounds = array<i64: 1, 8>}, {transform_indices = @transform_3, window_bounds = array<i64: 128, 8>}]} {
    %c0 = arith.constant 0 : index
    %c0_0 = arith.constant 0 : index
    %0 = vector.load %arg1[%c0, %c0_0] : memref<128x192xbf16, #tpu.memory_space<vmem>>, vector<128x192xbf16>
    %c0_1 = arith.constant 0 : index
    %c0_2 = arith.constant 0 : index
    %1 = vector.load %arg2[%c0_1, %c0_2] : memref<192x8xbf16, #tpu.memory_space<vmem>>, vector<192x8xbf16>
    %cst = arith.constant dense<0.000000e+00> : vector<128x8xf32>
    %2 = tpu.matmul %0, %1, %cst {dimension_numbers = #tpu.dot_dimension_numbers<[1], [0], [0], [1], [0, 0, 1, 1], [], []>} : vector<128x192xbf16>, vector<192x8xbf16>, vector<128x8xf32> -> vector<128x8xf32>
    %c0_3 = arith.constant 0 : index
    %c0_4 = arith.constant 0 : index
    %3 = vector.load %arg3[%c0_3, %c0_4] : memref<1x8xf32, #tpu.memory_space<vmem>>, vector<1x8xf32>
    %4 = vector.broadcast %3 : vector<1x8xf32> to vector<128x8xf32>
    %5 = arith.addf %2, %4 : vector<128x8xf32>
    %cst_5 = arith.constant 0.000000e+00 : f32
    %6 = vector.broadcast %cst_5 : f32 to vector<128x8xf32>
    %7 = arith.maximumf %5, %6 : vector<128x8xf32>
    %8 = arith.truncf %7 : vector<128x8xf32> to vector<128x8xbf16>
    %c0_6 = arith.constant 0 : index
    %c0_7 = arith.constant 0 : index
    %9 = vector.load %arg4[%c0_6, %c0_7] : memref<128x8xbf16, #tpu.memory_space<vmem>>, vector<128x8xbf16>
    tpu.vector_store %arg4[%c0_6, %c0_7], %8 {strides = array<i32>} : memref<128x8xbf16, #tpu.memory_space<vmem>>, vector<128x8xbf16>,
    return
  }
  func.func @transform_0(%arg0: i32) -> (i32, i32) {
    %c0_i32 = arith.constant 0 : i32
    %c0_i32_0 = arith.constant 0 : i32
    return %arg0, %c0_i32 : i32, i32
  }
  func.func @transform_1(%arg0: i32) -> (i32, i32) {
    %c0_i32 = arith.constant 0 : i32
    %c0_i32_0 = arith.constant 0 : i32
    %c0_i32_1 = arith.constant 0 : i32
    return %c0_i32, %c0_i32_0 : i32, i32
  }
  func.func @transform_2(%arg0: i32) -> (i32, i32) {
    %c0_i32 = arith.constant 0 : i32
    %c0_i32_0 = arith.constant 0 : i32
    %c0_i32_1 = arith.constant 0 : i32
    return %c0_i32, %c0_i32_0 : i32, i32
  }
  func.func @transform_3(%arg0: i32) -> (i32, i32) {
    %c0_i32 = arith.constant 0 : i32
    %c0_i32_0 = arith.constant 0 : i32
    return %arg0, %c0_i32 : i32, i32
  }
}

module attributes {stable_mosaic.version = 11 : i64} {
  func.func @_matmul_bias_relu_kernel(%arg0: i32, %arg1: memref<24x128xbf16, #tpu.memory_space<vmem>>, %arg2: memref<128x8xbf16, #tpu.memory_space<vmem>>, %arg3: memref<1x8xf32, #tpu.memory_space<vmem>>, %arg4: memref<24x8xbf16, #tpu.memory_space<vmem>>) attributes {dimension_semantics = [#tpu.dimension_semantics<parallel>], iteration_bounds = array<i64: 1>, scalar_prefetch = 0 : i64, scratch_operands = 0 : i64, tpu.core_type = #tpu.core_type<tc>, window_params = [{transform_indices = @transform_0, window_bounds = array<i64: 24, 128>}, {pipeline_mode = #tpu.pipeline_mode<synchronous>, transform_indices = @transform_1, window_bounds = array<i64: 128, 8>}, {pipeline_mode = #tpu.pipeline_mode<synchronous>, transform_indices = @transform_2, window_bounds = array<i64: 1, 8>}, {transform_indices = @transform_3, window_bounds = array<i64: 24, 8>}]} {
    %c0 = arith.constant 0 : index
    %c0_0 = arith.constant 0 : index
    %0 = vector.load %arg1[%c0, %c0_0] : memref<24x128xbf16, #tpu.memory_space<vmem>>, vector<24x128xbf16>
    %c0_1 = arith.constant 0 : index
    %c0_2 = arith.constant 0 : index
    %1 = vector.load %arg2[%c0_1, %c0_2] : memref<128x8xbf16, #tpu.memory_space<vmem>>, vector<128x8xbf16>
    %cst = arith.constant dense<0.000000e+00> : vector<24x8xf32>
    %2 = tpu.matmul %0, %1, %cst {dimension_numbers = #tpu.dot_dimension_numbers<[1], [0], [0], [1], [0, 0, 1, 1], [], []>} : vector<24x128xbf16>, vector<128x8xbf16>, vector<24x8xf32> -> vector<24x8xf32>
    %c0_3 = arith.constant 0 : index
    %c0_4 = arith.constant 0 : index
    %3 = vector.load %arg3[%c0_3, %c0_4] : memref<1x8xf32, #tpu.memory_space<vmem>>, vector<1x8xf32>
    %4 = vector.broadcast %3 : vector<1x8xf32> to vector<24x8xf32>
    %5 = arith.addf %2, %4 : vector<24x8xf32>
    %cst_5 = arith.constant 0.000000e+00 : f32
    %6 = vector.broadcast %cst_5 : f32 to vector<24x8xf32>
    %7 = arith.maximumf %5, %6 : vector<24x8xf32>
    %8 = arith.truncf %7 : vector<24x8xf32> to vector<24x8xbf16>
    %c0_6 = arith.constant 0 : index
    %c0_7 = arith.constant 0 : index
    %9 = vector.load %arg4[%c0_6, %c0_7] : memref<24x8xbf16, #tpu.memory_space<vmem>>, vector<24x8xbf16>
    tpu.vector_store %arg4[%c0_6, %c0_7], %8 {strides = array<i32>} : memref<24x8xbf16, #tpu.memory_space<vmem>>, vector<24x8xbf16>,
    return
  }
  func.func @transform_0(%arg0: i32) -> (i32, i32) {
    %c0_i32 = arith.constant 0 : i32
    %c0_i32_0 = arith.constant 0 : i32
    return %arg0, %c0_i32 : i32, i32
  }
  func.func @transform_1(%arg0: i32) -> (i32, i32) {
    %c0_i32 = arith.constant 0 : i32
    %c0_i32_0 = arith.constant 0 : i32
    %c0_i32_1 = arith.constant 0 : i32
    return %c0_i32, %c0_i32_0 : i32, i32
  }
  func.func @transform_2(%arg0: i32) -> (i32, i32) {
    %c0_i32 = arith.constant 0 : i32
    %c0_i32_0 = arith.constant 0 : i32
    %c0_i32_1 = arith.constant 0 : i32
    return %c0_i32, %c0_i32_0 : i32, i32
  }
  func.func @transform_3(%arg0: i32) -> (i32, i32) {
    %c0_i32 = arith.constant 0 : i32
    %c0_i32_0 = arith.constant 0 : i32
    return %arg0, %c0_i32 : i32, i32
  }
}

module attributes {stable_mosaic.version = 11 : i64} {
  func.func @_trunk_kernel(%arg0: memref<2x16xf32, #tpu.memory_space<vmem>>, %arg1: memref<2x32xf32, #tpu.memory_space<vmem>>, %arg2: memref<2x1xf32, #tpu.memory_space<vmem>>, %arg3: memref<16x32xf32, #tpu.memory_space<vmem>>, %arg4: memref<1x32xf32, #tpu.memory_space<vmem>>, %arg5: memref<32x96xf32, #tpu.memory_space<vmem>>, %arg6: memref<32x96xf32, #tpu.memory_space<vmem>>, %arg7: memref<1x96xf32, #tpu.memory_space<vmem>>, %arg8: memref<1x96xf32, #tpu.memory_space<vmem>>, %arg9: memref<32x128xf32, #tpu.memory_space<vmem>>, %arg10: memref<1x128xf32, #tpu.memory_space<vmem>>, %arg11: memref<2x32xf32, #tpu.memory_space<vmem>>, %arg12: memref<2x128xf32, #tpu.memory_space<vmem>>) attributes {dimension_semantics = [], scalar_prefetch = 0 : i64, scratch_operands = 0 : i64, tpu.core_type = #tpu.core_type<tc>} {
    %c0 = arith.constant 0 : index
    %c0_0 = arith.constant 0 : index
    %0 = vector.load %arg0[%c0, %c0_0] : memref<2x16xf32, #tpu.memory_space<vmem>>, vector<2x16xf32>
    %c0_1 = arith.constant 0 : index
    %c0_2 = arith.constant 0 : index
    %1 = vector.load %arg3[%c0_1, %c0_2] : memref<16x32xf32, #tpu.memory_space<vmem>>, vector<16x32xf32>
    %cst = arith.constant dense<0.000000e+00> : vector<2x32xf32>
    %2 = tpu.matmul %0, %1, %cst {dimension_numbers = #tpu.dot_dimension_numbers<[1], [0], [0], [1], [0, 0, 1, 1], [], []>} : vector<2x16xf32>, vector<16x32xf32>, vector<2x32xf32> -> vector<2x32xf32>
    %c0_3 = arith.constant 0 : index
    %c0_4 = arith.constant 0 : index
    %3 = vector.load %arg4[%c0_3, %c0_4] : memref<1x32xf32, #tpu.memory_space<vmem>>, vector<1x32xf32>
    %4 = vector.broadcast %3 : vector<1x32xf32> to vector<2x32xf32>
    %5 = arith.addf %2, %4 : vector<2x32xf32>
    %cst_5 = arith.constant 0.000000e+00 : f32
    %6 = vector.broadcast %cst_5 : f32 to vector<2x32xf32>
    %7 = arith.maximumf %5, %6 : vector<2x32xf32>
    %c0_6 = arith.constant 0 : index
    %c0_7 = arith.constant 0 : index
    %8 = vector.load %arg1[%c0_6, %c0_7] : memref<2x32xf32, #tpu.memory_space<vmem>>, vector<2x32xf32>
    %c0_8 = arith.constant 0 : index
    %c0_9 = arith.constant 0 : index
    %9 = vector.load %arg2[%c0_8, %c0_9] : memref<2x1xf32, #tpu.memory_space<vmem>>, vector<2x1xf32>
    %10 = vector.broadcast %9 : vector<2x1xf32> to vector<2x32xf32>
    %11 = arith.mulf %8, %10 : vector<2x32xf32>
    %c0_10 = arith.constant 0 : index
    %c0_11 = arith.constant 0 : index
    %12 = vector.load %arg5[%c0_10, %c0_11] : memref<32x96xf32, #tpu.memory_space<vmem>>, vector<32x96xf32>
    %cst_12 = arith.constant dense<0.000000e+00> : vector<2x96xf32>
    %13 = tpu.matmul %7, %12, %cst_12 {dimension_numbers = #tpu.dot_dimension_numbers<[1], [0], [0], [1], [0, 0, 1, 1], [], []>} : vector<2x32xf32>, vector<32x96xf32>, vector<2x96xf32> -> vector<2x96xf32>
    %c0_13 = arith.constant 0 : index
    %c0_14 = arith.constant 0 : index
    %14 = vector.load %arg7[%c0_13, %c0_14] : memref<1x96xf32, #tpu.memory_space<vmem>>, vector<1x96xf32>
    %15 = vector.broadcast %14 : vector<1x96xf32> to vector<2x96xf32>
    %16 = arith.addf %13, %15 : vector<2x96xf32>
    %c0_15 = arith.constant 0 : index
    %c0_16 = arith.constant 0 : index
    %17 = vector.load %arg6[%c0_15, %c0_16] : memref<32x96xf32, #tpu.memory_space<vmem>>, vector<32x96xf32>
    %cst_17 = arith.constant dense<0.000000e+00> : vector<2x96xf32>
    %18 = tpu.matmul %11, %17, %cst_17 {dimension_numbers = #tpu.dot_dimension_numbers<[1], [0], [0], [1], [0, 0, 1, 1], [], []>} : vector<2x32xf32>, vector<32x96xf32>, vector<2x96xf32> -> vector<2x96xf32>
    %c0_18 = arith.constant 0 : index
    %c0_19 = arith.constant 0 : index
    %19 = vector.load %arg8[%c0_18, %c0_19] : memref<1x96xf32, #tpu.memory_space<vmem>>, vector<1x96xf32>
    %20 = vector.broadcast %19 : vector<1x96xf32> to vector<2x96xf32>
    %21 = arith.addf %18, %20 : vector<2x96xf32>
    %22 = vector.extract_strided_slice %16 {offsets = [0, 0], sizes = [2, 32], strides = [1, 1]} : vector<2x96xf32> to vector<2x32xf32>
    %23 = vector.extract_strided_slice %21 {offsets = [0, 0], sizes = [2, 32], strides = [1, 1]} : vector<2x96xf32> to vector<2x32xf32>
    %24 = arith.addf %22, %23 : vector<2x32xf32>
    %25 = arith.negf %24 : vector<2x32xf32>
    %26 = math.exp %25 : vector<2x32xf32>
    %cst_20 = arith.constant 1.000000e+00 : f32
    %27 = vector.broadcast %cst_20 : f32 to vector<2x32xf32>
    %28 = arith.addf %27, %26 : vector<2x32xf32>
    %29 = arith.divf %27, %28 : vector<2x32xf32>
    %30 = vector.extract_strided_slice %16 {offsets = [0, 32], sizes = [2, 32], strides = [1, 1]} : vector<2x96xf32> to vector<2x32xf32>
    %31 = vector.extract_strided_slice %21 {offsets = [0, 32], sizes = [2, 32], strides = [1, 1]} : vector<2x96xf32> to vector<2x32xf32>
    %32 = arith.addf %30, %31 : vector<2x32xf32>
    %33 = arith.negf %32 : vector<2x32xf32>
    %34 = math.exp %33 : vector<2x32xf32>
    %cst_21 = arith.constant 1.000000e+00 : f32
    %35 = vector.broadcast %cst_21 : f32 to vector<2x32xf32>
    %36 = arith.addf %35, %34 : vector<2x32xf32>
    %37 = arith.divf %35, %36 : vector<2x32xf32>
    %38 = vector.extract_strided_slice %16 {offsets = [0, 64], sizes = [2, 32], strides = [1, 1]} : vector<2x96xf32> to vector<2x32xf32>
    %39 = vector.extract_strided_slice %21 {offsets = [0, 64], sizes = [2, 32], strides = [1, 1]} : vector<2x96xf32> to vector<2x32xf32>
    %40 = arith.mulf %29, %39 : vector<2x32xf32>
    %41 = arith.addf %38, %40 : vector<2x32xf32>
    %42 = math.tanh %41 : vector<2x32xf32>
    %cst_22 = arith.constant 1.000000e+00 : f32
    %43 = vector.broadcast %cst_22 : f32 to vector<2x32xf32>
    %44 = arith.subf %43, %37 : vector<2x32xf32>
    %45 = arith.mulf %44, %42 : vector<2x32xf32>
    %46 = arith.mulf %37, %11 : vector<2x32xf32>
    %47 = arith.addf %45, %46 : vector<2x32xf32>
    %c0_23 = arith.constant 0 : index
    %c0_24 = arith.constant 0 : index
    %48 = vector.load %arg11[%c0_23, %c0_24] : memref<2x32xf32, #tpu.memory_space<vmem>>, vector<2x32xf32>
    tpu.vector_store %arg11[%c0_23, %c0_24], %47 {strides = array<i32>} : memref<2x32xf32, #tpu.memory_space<vmem>>, vector<2x32xf32>,
    %c0_25 = arith.constant 0 : index
    %c0_26 = arith.constant 0 : index
    %49 = vector.load %arg9[%c0_25, %c0_26] : memref<32x128xf32, #tpu.memory_space<vmem>>, vector<32x128xf32>
    %cst_27 = arith.constant dense<0.000000e+00> : vector<2x128xf32>
    %50 = tpu.matmul %47, %49, %cst_27 {dimension_numbers = #tpu.dot_dimension_numbers<[1], [0], [0], [1], [0, 0, 1, 1], [], []>} : vector<2x32xf32>, vector<32x128xf32>, vector<2x128xf32> -> vector<2x128xf32>
    %c0_28 = arith.constant 0 : index
    %c0_29 = arith.constant 0 : index
    %51 = vector.load %arg10[%c0_28, %c0_29] : memref<1x128xf32, #tpu.memory_space<vmem>>, vector<1x128xf32>
    %52 = vector.broadcast %51 : vector<1x128xf32> to vector<2x128xf32>
    %53 = arith.addf %50, %52 : vector<2x128xf32>
    %54 = tpu.iota {dimensions = array<i32: 1>} : vector<2x128xi32>
    %c6_i32 = arith.constant 6 : i32
    %55 = vector.broadcast %c6_i32 : i32 to vector<2x128xi32>
    %56 = arith.cmpi slt, %54, %55 : vector<2x128xi32>
    %c6_i32_30 = arith.constant 6 : i32
    %57 = vector.broadcast %c6_i32_30 : i32 to vector<2x128xi32>
    %58 = arith.cmpi eq, %54, %57 : vector<2x128xi32>
    %c7_i32 = arith.constant 7 : i32
    %59 = vector.broadcast %c7_i32 : i32 to vector<2x128xi32>
    %60 = arith.cmpi eq, %54, %59 : vector<2x128xi32>
    %cst_31 = arith.constant 0xFF800000 : f32
    %61 = vector.broadcast %cst_31 : f32 to vector<2x128xf32>
    %62 = arith.select %56, %53, %61 : vector<2x128xi1>, vector<2x128xf32>
    %cst_32 = arith.constant dense<0xFF800000> : vector<2xf32>
    %63 = vector.multi_reduction <maximumf>, %62, %cst_32 [1] : vector<2x128xf32> to vector<2xf32>
    %64 = vector.shape_cast %63 : vector<2xf32> to vector<2x1xf32>
    %65 = vector.broadcast %64 : vector<2x1xf32> to vector<2x128xf32>
    %66 = arith.subf %53, %65 : vector<2x128xf32>
    %67 = math.exp %66 : vector<2x128xf32>
    %cst_33 = arith.constant 0.000000e+00 : f32
    %68 = vector.broadcast %cst_33 : f32 to vector<2x128xf32>
    %69 = arith.select %56, %67, %68 : vector<2x128xi1>, vector<2x128xf32>
    %cst_34 = arith.constant dense<0.000000e+00> : vector<2xf32>
    %70 = vector.multi_reduction <add>, %69, %cst_34 [1] : vector<2x128xf32> to vector<2xf32>
    %71 = vector.shape_cast %70 : vector<2xf32> to vector<2x1xf32>
    %72 = math.log %71 : vector<2x1xf32>
    %73 = arith.addf %64, %72 : vector<2x1xf32>
    %74 = vector.broadcast %73 : vector<2x1xf32> to vector<2x128xf32>
    %75 = arith.subf %53, %74 : vector<2x128xf32>
    %76 = tpu.reciprocal %71 {approx = true} : vector<2x1xf32> -> vector<2x1xf32>
    %77 = arith.mulf %69, %75 : vector<2x128xf32>
    %cst_35 = arith.constant 0.000000e+00 : f32
    %78 = vector.broadcast %cst_35 : f32 to vector<2x128xf32>
    %79 = arith.select %56, %77, %78 : vector<2x128xi1>, vector<2x128xf32>
    %cst_36 = arith.constant dense<0.000000e+00> : vector<2xf32>
    %80 = vector.multi_reduction <add>, %79, %cst_36 [1] : vector<2x128xf32> to vector<2xf32>
    %81 = vector.shape_cast %80 : vector<2xf32> to vector<2x1xf32>
    %cst_37 = arith.constant 0.000000e+00 : f32
    %82 = vector.broadcast %cst_37 : f32 to vector<2x1xf32>
    %83 = arith.subf %82, %81 : vector<2x1xf32>
    %84 = arith.mulf %83, %76 : vector<2x1xf32>
    %cst_38 = arith.constant 0.000000e+00 : f32
    %85 = vector.broadcast %cst_38 : f32 to vector<2x128xf32>
    %86 = arith.select %56, %75, %85 : vector<2x128xi1>, vector<2x128xf32>
    %cst_39 = arith.constant 0.000000e+00 : f32
    %87 = vector.broadcast %cst_39 : f32 to vector<2x128xf32>
    %88 = arith.select %58, %53, %87 : vector<2x128xi1>, vector<2x128xf32>
    %89 = arith.addf %86, %88 : vector<2x128xf32>
    %cst_40 = arith.constant 0.000000e+00 : f32
    %90 = vector.shape_cast %84 : vector<2x1xf32> to vector<2x1xf32>
    %91 = vector.broadcast %90 : vector<2x1xf32> to vector<2x128xf32>
    %92 = vector.broadcast %cst_40 : f32 to vector<2x128xf32>
    %93 = arith.select %60, %91, %92 : vector<2x128xi1>, vector<2x128xf32>
    %94 = arith.addf %89, %93 : vector<2x128xf32>
    %c0_41 = arith.constant 0 : index
    %c0_42 = arith.constant 0 : index
    %95 = vector.load %arg12[%c0_41, %c0_42] : memref<2x128xf32, #tpu.memory_space<vmem>>, vector<2x128xf32>
    tpu.vector_store %arg12[%c0_41, %c0_42], %94 {strides = array<i32>} : memref<2x128xf32, #tpu.memory_space<vmem>>, vector<2x128xf32>,
    return
  }
}

module attributes {stable_mosaic.version = 11 : i64} {
  func.func @_matmul_bias_relu_kernel(%arg0: i32, %arg1: memref<8x72xbf16, #tpu.memory_space<vmem>>, %arg2: memref<72x16xbf16, #tpu.memory_space<vmem>>, %arg3: memref<1x16xf32, #tpu.memory_space<vmem>>, %arg4: memref<8x16xf32, #tpu.memory_space<vmem>>) attributes {dimension_semantics = [#tpu.dimension_semantics<parallel>], iteration_bounds = array<i64: 1>, scalar_prefetch = 0 : i64, scratch_operands = 0 : i64, tpu.core_type = #tpu.core_type<tc>, window_params = [{transform_indices = @transform_0, window_bounds = array<i64: 8, 72>}, {pipeline_mode = #tpu.pipeline_mode<synchronous>, transform_indices = @transform_1, window_bounds = array<i64: 72, 16>}, {pipeline_mode = #tpu.pipeline_mode<synchronous>, transform_indices = @transform_2, window_bounds = array<i64: 1, 16>}, {transform_indices = @transform_3, window_bounds = array<i64: 8, 16>}]} {
    %c0 = arith.constant 0 : index
    %c0_0 = arith.constant 0 : index
    %0 = vector.load %arg1[%c0, %c0_0] : memref<8x72xbf16, #tpu.memory_space<vmem>>, vector<8x72xbf16>
    %c0_1 = arith.constant 0 : index
    %c0_2 = arith.constant 0 : index
    %1 = vector.load %arg2[%c0_1, %c0_2] : memref<72x16xbf16, #tpu.memory_space<vmem>>, vector<72x16xbf16>
    %cst = arith.constant dense<0.000000e+00> : vector<8x16xf32>
    %2 = tpu.matmul %0, %1, %cst {dimension_numbers = #tpu.dot_dimension_numbers<[1], [0], [0], [1], [0, 0, 1, 1], [], []>} : vector<8x72xbf16>, vector<72x16xbf16>, vector<8x16xf32> -> vector<8x16xf32>
    %c0_3 = arith.constant 0 : index
    %c0_4 = arith.constant 0 : index
    %3 = vector.load %arg3[%c0_3, %c0_4] : memref<1x16xf32, #tpu.memory_space<vmem>>, vector<1x16xf32>
    %4 = vector.broadcast %3 : vector<1x16xf32> to vector<8x16xf32>
    %5 = arith.addf %2, %4 : vector<8x16xf32>
    %cst_5 = arith.constant 0.000000e+00 : f32
    %6 = vector.broadcast %cst_5 : f32 to vector<8x16xf32>
    %7 = arith.maximumf %5, %6 : vector<8x16xf32>
    %c0_6 = arith.constant 0 : index
    %c0_7 = arith.constant 0 : index
    %8 = vector.load %arg4[%c0_6, %c0_7] : memref<8x16xf32, #tpu.memory_space<vmem>>, vector<8x16xf32>
    tpu.vector_store %arg4[%c0_6, %c0_7], %7 {strides = array<i32>} : memref<8x16xf32, #tpu.memory_space<vmem>>, vector<8x16xf32>,
    return
  }
  func.func @transform_0(%arg0: i32) -> (i32, i32) {
    %c0_i32 = arith.constant 0 : i32
    %c0_i32_0 = arith.constant 0 : i32
    return %arg0, %c0_i32 : i32, i32
  }
  func.func @transform_1(%arg0: i32) -> (i32, i32) {
    %c0_i32 = arith.constant 0 : i32
    %c0_i32_0 = arith.constant 0 : i32
    %c0_i32_1 = arith.constant 0 : i32
    return %c0_i32, %c0_i32_0 : i32, i32
  }
  func.func @transform_2(%arg0: i32) -> (i32, i32) {
    %c0_i32 = arith.constant 0 : i32
    %c0_i32_0 = arith.constant 0 : i32
    %c0_i32_1 = arith.constant 0 : i32
    return %c0_i32, %c0_i32_0 : i32, i32
  }
  func.func @transform_3(%arg0: i32) -> (i32, i32) {
    %c0_i32 = arith.constant 0 : i32
    %c0_i32_0 = arith.constant 0 : i32
    return %arg0, %c0_i32 : i32, i32
  }
}

</mosaic_0001>

<llo_original>
// kernel: forward.4
$region0: #{forward.4}
  #allocation0 [shape = 'u32[]', space=smem, size = 0x4, offset = 0x4, fixed_abs, tag = 'smem constant byte address 0x4 - core index']
  #allocation1 [shape = 'u32[144,128]{1,0:T(1,128)}', space=vmem, size = 0x12000, scoped, tag = 'internal scratch']
  %s0 = inlined_call_operand.vmem [shape: bf16[128,192], index: 0, kind: input, shape index: {}]
  %s1 = inlined_call_operand.vmem [shape: bf16[192,8], index: 1, kind: input, shape index: {}]
  %s2 = inlined_call_operand.vmem [shape: f32[1,8], index: 2, kind: input, shape index: {}]
  %s3 = inlined_call_operand.vmem [shape: bf16[128,8], index: 3, kind: output, shape index: {}]
  %s4 = sld [smem:[#allocation0]]
  $region22: #{forward.4} parent=0
    _
  %s6 = ssub.s32 1, %s4
  %s7 = scalar_select 0, %s6, %s4
  // Predicated region
  $region2: #{forward.4} parent=0 // pred_check
    _
  $region3: #{forward.4} parent=0 // pred_check_branch
    %9 = sbr.rel (0) target = $region5
  $region4: #{forward.4} parent=0 // pred_region
    _
  $region5: #{forward.4} parent=0 // pred_fallthru
    _
  // Predicated region
  $region6: #{forward.4} parent=0 // pred_check
    _
  $region7: #{forward.4} parent=0 // pred_check_branch
    %11 = sbr.rel (0) target = $region9
  $region8: #{forward.4} parent=0 // pred_region
    _
  $region9: #{forward.4} parent=0 // pred_fallthru
    _
  // Predicated region
  $region10: #{forward.4} parent=0 // pred_check
    _
  $region11: #{forward.4} parent=0 // pred_check_branch
    %13 = sbr.rel (0) target = $region13
  $region12: #{forward.4} parent=0 // pred_region
    _
  $region13: #{forward.4} parent=0 // pred_fallthru
    _
  %v15 = vld [vmem:[%s0] sm:$0xff]
  %v16 = vld [vmem:[%s0 + $0x8] sm:$0xff]
  %v17 = vld [vmem:[%s0 + $0x10] sm:$0xff]
  %v18 = vld [vmem:[%s0 + $0x18] sm:$0xff]
  %v19 = vld [vmem:[%s0 + $0x20] sm:$0xff]
  %v20 = vld [vmem:[%s0 + $0x28] sm:$0xff]
  %v21 = vld [vmem:[%s0 + $0x30] sm:$0xff]
  %v22 = vld [vmem:[%s0 + $0x38] sm:$0xff]
  %v23 = vld [vmem:[%s0 + $0x40] sm:$0xff]
  %v24 = vld [vmem:[%s0 + $0x48] sm:$0xff]
  %v25 = vld [vmem:[%s0 + $0x50] sm:$0xff]
  %v26 = vld [vmem:[%s0 + $0x58] sm:$0xff]
  %v27 = vld [vmem:[%s0 + $0x60] sm:$0xff]
  %v28 = vld [vmem:[%s0 + $0x68] sm:$0xff]
  %v29 = vld [vmem:[%s0 + $0x70] sm:$0xff]
  %v30 = vld [vmem:[%s0 + $0x78] sm:$0xff]
  %v31 = vld [vmem:[%s1] sm:$0xf]
  %v32 = vld [vmem:[%s1 + $0x4] sm:$0xf]
  %v33 = vld [vmem:[%s1 + $0x8] sm:$0xf]
  %v34 = vld [vmem:[%s1 + $0xc] sm:$0xf]
  %v35 = vld [vmem:[%s1 + $0x10] sm:$0xf]
  %v36 = vld [vmem:[%s1 + $0x14] sm:$0xf]
  %v37 = vld [vmem:[%s1 + $0x18] sm:$0xf]
  %v38 = vld [vmem:[%s1 + $0x1c] sm:$0xf]
  %v39 = vld [vmem:[%s1 + $0x20] sm:$0xf]
  %v40 = vld [vmem:[%s1 + $0x24] sm:$0xf]
  %v41 = vld [vmem:[%s1 + $0x28] sm:$0xf]
  %v42 = vld [vmem:[%s1 + $0x2c] sm:$0xf]
  %v43 = vld [vmem:[%s1 + $0x30] sm:$0xf]
  %v44 = vld [vmem:[%s1 + $0x34] sm:$0xf]
  %v45 = vld [vmem:[%s1 + $0x38] sm:$0xf]
  %v46 = vld [vmem:[%s1 + $0x3c] sm:$0xf]
  %v47 = vld [vmem:[%s1 + $0x40] sm:$0xf]
  %v48 = vld [vmem:[%s1 + $0x44] sm:$0xf]
  %v49 = vld [vmem:[%s1 + $0x48] sm:$0xf]
  %v50 = vld [vmem:[%s1 + $0x4c] sm:$0xf]
  %v51 = vld [vmem:[%s1 + $0x50] sm:$0xf]
  %v52 = vld [vmem:[%s1 + $0x54] sm:$0xf]
  %v53 = vld [vmem:[%s1 + $0x58] sm:$0xf]
  %v54 = vld [vmem:[%s1 + $0x5c] sm:$0xf]
  %v55 = vld [vmem:[%s2] sm:$0x1]
  %v57 = vlaneseq
  %v58 = vshrl.u32 %v57, 7
  %v59 = vsub.s32 0, %v58
  %v60 = vrot.slane %v55, %v59
  %v78 = vunpack.c.l.b16 %v15
  %v79 = vunpack.c.h.b16 %v15
  %v80 = vunpack.c.l.b16 %v16
  %v81 = vunpack.c.h.b16 %v16
  %v82 = vunpack.c.l.b16 %v17
  %v83 = vunpack.c.h.b16 %v17
  %v84 = vunpack.c.l.b16 %v18
  %v85 = vunpack.c.h.b16 %v18
  %v86 = vunpack.c.l.b16 %v19
  %v87 = vunpack.c.h.b16 %v19
  %v88 = vunpack.c.l.b16 %v20
  %v89 = vunpack.c.h.b16 %v20
  %v90 = vunpack.c.l.b16 %v21
  %v91 = vunpack.c.h.b16 %v21
  %v92 = vunpack.c.l.b16 %v22
  %v93 = vunpack.c.h.b16 %v22
  %v94 = vunpack.c.l.b16 %v23
  %v95 = vunpack.c.h.b16 %v23
  %v96 = vunpack.c.l.b16 %v24
  %v97 = vunpack.c.h.b16 %v24
  %v98 = vunpack.c.l.b16 %v25
  %v99 = vunpack.c.h.b16 %v25
  %v100 = vunpack.c.l.b16 %v26
  %v101 = vunpack.c.h.b16 %v26
  %v102 = vunpack.c.l.b16 %v27
  %v103 = vunpack.c.h.b16 %v27
  %v104 = vunpack.c.l.b16 %v28
  %v105 = vunpack.c.h.b16 %v28
  %v106 = vunpack.c.l.b16 %v29
  %v107 = vunpack.c.h.b16 %v29
  %v108 = vunpack.c.l.b16 %v30
  %v109 = vunpack.c.h.b16 %v30
  %v110 = vpack.c.b16 %v80, %v78
  %v111 = vpack.c.b16 %v81, %v79
  %v112 = vpack.c.b16 %v84, %v82
  %v113 = vpack.c.b16 %v85, %v83
  %v114 = vpack.c.b16 %v88, %v86
  %v115 = vpack.c.b16 %v89, %v87
  %v116 = vpack.c.b16 %v92, %v90
  %v117 = vpack.c.b16 %v93, %v91
  %v118 = vpack.c.b16 %v96, %v94
  %v119 = vpack.c.b16 %v97, %v95
  %v120 = vpack.c.b16 %v100, %v98
  %v121 = vpack.c.b16 %v101, %v99
  %v122 = vpack.c.b16 %v104, %v102
  %v123 = vpack.c.b16 %v105, %v103
  %v124 = vpack.c.b16 %v108, %v106
  %v125 = vpack.c.b16 %v109, %v107
  %v158 = vunpack.c.l.b16 %v31
  %v159 = vunpack.c.l.b16 %v32
  %v160 = vunpack.c.l.b16 %v33
  %v161 = vunpack.c.l.b16 %v34
  %v162 = vunpack.c.l.b16 %v35
  %v163 = vunpack.c.l.b16 %v36
  %v164 = vunpack.c.l.b16 %v37
  %v165 = vunpack.c.l.b16 %v38
  %v166 = vunpack.c.l.b16 %v39
  %v167 = vunpack.c.l.b16 %v40
  %v168 = vunpack.c.l.b16 %v41
  %v169 = vunpack.c.l.b16 %v42
  %v170 = vunpack.c.l.b16 %v43
  %v171 = vunpack.c.l.b16 %v44
  %v172 = vunpack.c.l.b16 %v45
  %v173 = vunpack.c.l.b16 %v46
  %v174 = vunpack.c.l.b16 %v47
  %v175 = vunpack.c.l.b16 %v48
  %v176 = vunpack.c.l.b16 %v49
  %v177 = vunpack.c.l.b16 %v50
  %v178 = vunpack.c.l.b16 %v51
  %v179 = vunpack.c.l.b16 %v52
  %v180 = vunpack.c.l.b16 %v53
  %v181 = vunpack.c.l.b16 %v54
  %v182 = vpack.c.b16 %v159, %v158
  %v183 = vpack.c.b16 %v161, %v160
  %v184 = vpack.c.b16 %v163, %v162
  %v185 = vpack.c.b16 %v165, %v164
  %v186 = vpack.c.b16 %v167, %v166
  %v187 = vpack.c.b16 %v169, %v168
  %v188 = vpack.c.b16 %v171, %v170
  %v189 = vpack.c.b16 %v173, %v172
  %v190 = vpack.c.b16 %v175, %v174
  %v191 = vpack.c.b16 %v177, %v176
  %v192 = vpack.c.b16 %v179, %v178
  %v193 = vpack.c.b16 %v181, %v180
  %vm206 = vcmask 523264
  %v208 = vsel %vm206, %v111, 0
  %v211 = vsel %vm206, %v113, 0
  %v214 = vsel %vm206, %v115, 0
  %v217 = vsel %vm206, %v117, 0
  %v220 = vsel %vm206, %v119, 0
  %v223 = vsel %vm206, %v121, 0
  %v226 = vsel %vm206, %v123, 0
  %v229 = vsel %vm206, %v125, 0
  %231 = vmatprep.subr.bf16.mxu0 0
  %232 = vmatpush1.bf16.msra.mxu0 %v189
  %233 = vmatprep.subr.bf16.mxu0 0
  %234 = vmatpush1.bf16.msra.mxu0 %v188
  %235 = vmatprep.subr.bf16.mxu0 0
  %236 = vmatpush1.bf16.msra.mxu0 %v187
  %237 = vmatprep.subr.bf16.mxu0 0
  %238 = vmatpush1.bf16.msra.mxu0 %v186
  %239 = vmatprep.subr.bf16.mxu0 0
  %240 = vmatpush1.bf16.msra.mxu0 %v185
  %241 = vmatprep.subr.bf16.mxu0 0
  %242 = vmatpush1.bf16.msra.mxu0 %v184
  %243 = vmatprep.subr.bf16.mxu0 0
  %244 = vmatpush1.bf16.msra.mxu0 %v183
  %245 = vmatprep.subr.bf16.mxu0 0
  %246 = vmatpush1.bf16.msra.mxu0 %v182
  %247 = vmatprep.subr.bf16.mxu0 0
  %248 = vmatpush2.bf16.msra.mxu0 0
  %249 = vmatprep.subr.bf16.mxu0 0
  %250 = vmatpush2.bf16.msra.mxu0 0
  %251 = vmatprep.subr.bf16.mxu0 0
  %252 = vmatpush2.bf16.msra.mxu0 0
  %253 = vmatprep.subr.bf16.mxu0 0
  %254 = vmatpush2.bf16.msra.mxu0 0
  %255 = vmatprep.subr.bf16.mxu0 0
  %256 = vmatpush2.bf16.msra.mxu0 %v193
  %257 = vmatprep.subr.bf16.mxu0 0
  %258 = vmatpush2.bf16.msra.mxu0 %v192
  %259 = vmatprep.subr.bf16.mxu0 0
  %260 = vmatpush2.bf16.msra.mxu0 %v191
  %261 = vmatprep.subr.bf16.mxu0 0
  %262 = vmatpush2.bf16.msra.mxu0 %v190
  %263 = vmatprep.mubr.bf16.mxu0 %v208
  %264 = vmatmul.mubr.bf16.gmra.mxu0 %v110
  %v265 = vpop.f32.mrf.mxu0
  %v266 = vadd.f32 %v60, %v265
  %v267 = vpop.f32.mrf.mxu0
  %v268 = vpop.f32.mrf.mxu0
  %v269 = vadd.f32 %v60, %v268
  %v270 = vpop.f32.mrf.mxu0
  %271 = vmatprep.mubr.bf16.mxu0 %v211
  %272 = vmatmul.mubr.bf16.gmra.mxu0 %v112
  %v273 = vpop.f32.mrf.mxu0
  %v274 = vadd.f32 %v60, %v273
  %v275 = vpop.f32.mrf.mxu0
  %v276 = vpop.f32.mrf.mxu0
  %v277 = vadd.f32 %v60, %v276
  %v278 = vpop.f32.mrf.mxu0
  %279 = vmatprep.mubr.bf16.mxu0 %v214
  %280 = vmatmul.mubr.bf16.gmra.mxu0 %v114
  %v281 = vpop.f32.mrf.mxu0
  %v282 = vadd.f32 %v60, %v281
  %v283 = vpop.f32.mrf.mxu0
  %v284 = vpop.f32.mrf.mxu0
  %v285 = vadd.f32 %v60, %v284
  %v286 = vpop.f32.mrf.mxu0
  %287 = vmatprep.mubr.bf16.mxu0 %v217
  %288 = vmatmul.mubr.bf16.gmra.mxu0 %v116
  %v289 = vpop.f32.mrf.mxu0
  %v290 = vadd.f32 %v60, %v289
  %v291 = vpop.f32.mrf.mxu0
  %v292 = vpop.f32.mrf.mxu0
  %v293 = vadd.f32 %v60, %v292
  %v294 = vpop.f32.mrf.mxu0
  %295 = vmatprep.mubr.bf16.mxu0 %v220
  %296 = vmatmul.mubr.bf16.gmra.mxu0 %v118
  %v297 = vpop.f32.mrf.mxu0
  %v298 = vadd.f32 %v60, %v297
  %v299 = vpop.f32.mrf.mxu0
  %v300 = vpop.f32.mrf.mxu0
  %v301 = vadd.f32 %v60, %v300
  %v302 = vpop.f32.mrf.mxu0
  %303 = vmatprep.mubr.bf16.mxu0 %v223
  %304 = vmatmul.mubr.bf16.gmra.mxu0 %v120
  %v305 = vpop.f32.mrf.mxu0
  %v306 = vadd.f32 %v60, %v305
  %v307 = vpop.f32.mrf.mxu0
  %v308 = vpop.f32.mrf.mxu0
  %v309 = vadd.f32 %v60, %v308
  %v310 = vpop.f32.mrf.mxu0
  %311 = vmatprep.mubr.bf16.mxu0 %v226
  %312 = vmatmul.mubr.bf16.gmra.mxu0 %v122
  %v313 = vpop.f32.mrf.mxu0
  %v314 = vadd.f32 %v60, %v313
  %v315 = vpop.f32.mrf.mxu0
  %v316 = vpop.f32.mrf.mxu0
  %v317 = vadd.f32 %v60, %v316
  %v318 = vpop.f32.mrf.mxu0
  %319 = vmatprep.mubr.bf16.mxu0 %v229
  %320 = vmatmul.mubr.bf16.gmra.mxu0 %v124
  %v321 = vpop.f32.mrf.mxu0
  %v322 = vadd.f32 %v60, %v321
  %v323 = vpop.f32.mrf.mxu0
  %v324 = vpop.f32.mrf.mxu0
  %v325 = vadd.f32 %v60, %v324
  %v326 = vpop.f32.mrf.mxu0
  %327 = vdwg.mxu0
  %v328 = vmax.f32 %v266, 0.0
  %v329 = vmax.f32 %v269, 0.0
  %v330 = vmax.f32 %v274, 0.0
  %v331 = vmax.f32 %v277, 0.0
  %v332 = vmax.f32 %v282, 0.0
  %v333 = vmax.f32 %v285, 0.0
  %v334 = vmax.f32 %v290, 0.0
  %v335 = vmax.f32 %v293, 0.0
  %v336 = vmax.f32 %v298, 0.0
  %v337 = vmax.f32 %v301, 0.0
  %v338 = vmax.f32 %v306, 0.0
  %v339 = vmax.f32 %v309, 0.0
  %v340 = vmax.f32 %v314, 0.0
  %v341 = vmax.f32 %v317, 0.0
  %v342 = vmax.f32 %v322, 0.0
  %v343 = vmax.f32 %v325, 0.0
  %v344 = vpack.c.bf16 %v329, %v328
  %v345 = vpack.c.bf16 %v331, %v330
  %v346 = vpack.c.bf16 %v333, %v332
  %v347 = vpack.c.bf16 %v335, %v334
  %v348 = vpack.c.bf16 %v337, %v336
  %v349 = vpack.c.bf16 %v339, %v338
  %v350 = vpack.c.bf16 %v341, %v340
  %v351 = vpack.c.bf16 %v343, %v342
  %v360 = vunpack.c.l.b16 %v344
  %v361 = vunpack.c.h.b16 %v344
  %v362 = vunpack.c.l.b16 %v345
  %v363 = vunpack.c.h.b16 %v345
  %v364 = vunpack.c.l.b16 %v346
  %v365 = vunpack.c.h.b16 %v346
  %v366 = vunpack.c.l.b16 %v347
  %v367 = vunpack.c.h.b16 %v347
  %v368 = vunpack.c.l.b16 %v348
  %v369 = vunpack.c.h.b16 %v348
  %v370 = vunpack.c.l.b16 %v349
  %v371 = vunpack.c.h.b16 %v349
  %v372 = vunpack.c.l.b16 %v350
  %v373 = vunpack.c.h.b16 %v350
  %v374 = vunpack.c.l.b16 %v351
  %v375 = vunpack.c.h.b16 %v351
  %v376 = vpack.c.b16 %v360, %v360
  %v377 = vpack.c.b16 %v361, %v361
  %v378 = vpack.c.b16 %v362, %v362
  %v379 = vpack.c.b16 %v363, %v363
  %v380 = vpack.c.b16 %v364, %v364
  %v381 = vpack.c.b16 %v365, %v365
  %v382 = vpack.c.b16 %v366, %v366
  %v383 = vpack.c.b16 %v367, %v367
  %v384 = vpack.c.b16 %v368, %v368
  %v385 = vpack.c.b16 %v369, %v369
  %v386 = vpack.c.b16 %v370, %v370
  %v387 = vpack.c.b16 %v371, %v371
  %v388 = vpack.c.b16 %v372, %v372
  %v389 = vpack.c.b16 %v373, %v373
  %v390 = vpack.c.b16 %v374, %v374
  %v391 = vpack.c.b16 %v375, %v375
  %vm408 = vcmask 60416
  %409 = vst.msk [vmem:[%s3] sm:$0xf] %vm408, %v376
  %410 = vst.msk [vmem:[%s3 + $0x4] sm:$0xf] %vm408, %v377
  %411 = vst.msk [vmem:[%s3 + $0x8] sm:$0xf] %vm408, %v378
  %412 = vst.msk [vmem:[%s3 + $0xc] sm:$0xf] %vm408, %v379
  %413 = vst.msk [vmem:[%s3 + $0x10] sm:$0xf] %vm408, %v380
  %414 = vst.msk [vmem:[%s3 + $0x14] sm:$0xf] %vm408, %v381
  %415 = vst.msk [vmem:[%s3 + $0x18] sm:$0xf] %vm408, %v382
  %416 = vst.msk [vmem:[%s3 + $0x1c] sm:$0xf] %vm408, %v383
  %417 = vst.msk [vmem:[%s3 + $0x20] sm:$0xf] %vm408, %v384
  %418 = vst.msk [vmem:[%s3 + $0x24] sm:$0xf] %vm408, %v385
  %419 = vst.msk [vmem:[%s3 + $0x28] sm:$0xf] %vm408, %v386
  %420 = vst.msk [vmem:[%s3 + $0x2c] sm:$0xf] %vm408, %v387
  %421 = vst.msk [vmem:[%s3 + $0x30] sm:$0xf] %vm408, %v388
  %422 = vst.msk [vmem:[%s3 + $0x34] sm:$0xf] %vm408, %v389
  %423 = vst.msk [vmem:[%s3 + $0x38] sm:$0xf] %vm408, %v390
  %424 = vst.msk [vmem:[%s3 + $0x3c] sm:$0xf] %vm408, %v391
  // Predicated region
  $region14: #{forward.4} parent=0 // pred_check
    _
  $region15: #{forward.4} parent=0 // pred_check_branch
    %426 = sbr.rel (0) target = $region17
  $region16: #{forward.4} parent=0 // pred_region
    _
  $region17: #{forward.4} parent=0 // pred_fallthru
    _
  // Predicated region
  $region18: #{forward.4} parent=0 // pred_check
    _
  $region19: #{forward.4} parent=0 // pred_check_branch
    %428 = sbr.rel (0) target = $region21
  $region20: #{forward.4} parent=0 // pred_region
    _
  $region21: #{forward.4} parent=0 // pred_fallthru
    _

// kernel: forward.5
$region0: #{forward.5}
  #allocation0 [shape = 'u32[]', space=smem, size = 0x4, offset = 0x4, fixed_abs, tag = 'smem constant byte address 0x4 - core index']
  #allocation1 [shape = 'u32[144,128]{1,0:T(1,128)}', space=vmem, size = 0x12000, scoped, tag = 'internal scratch']
  %s0 = inlined_call_operand.vmem [shape: bf16[24,128], index: 0, kind: input, shape index: {}]
  %s1 = inlined_call_operand.vmem [shape: bf16[128,8], index: 1, kind: input, shape index: {}]
  %s2 = inlined_call_operand.vmem [shape: f32[1,8], index: 2, kind: input, shape index: {}]
  %s3 = inlined_call_operand.vmem [shape: bf16[24,8], index: 3, kind: output, shape index: {}]
  %s4 = sld [smem:[#allocation0]]
  $region22: #{forward.5} parent=0
    _
  %s6 = ssub.s32 1, %s4
  %s7 = scalar_select 0, %s6, %s4
  // Predicated region
  $region2: #{forward.5} parent=0 // pred_check
    _
  $region3: #{forward.5} parent=0 // pred_check_branch
    %9 = sbr.rel (0) target = $region5
  $region4: #{forward.5} parent=0 // pred_region
    _
  $region5: #{forward.5} parent=0 // pred_fallthru
    _
  // Predicated region
  $region6: #{forward.5} parent=0 // pred_check
    _
  $region7: #{forward.5} parent=0 // pred_check_branch
    %11 = sbr.rel (0) target = $region9
  $region8: #{forward.5} parent=0 // pred_region
    _
  $region9: #{forward.5} parent=0 // pred_fallthru
    _
  // Predicated region
  $region10: #{forward.5} parent=0 // pred_check
    _
  $region11: #{forward.5} parent=0 // pred_check_branch
    %13 = sbr.rel (0) target = $region13
  $region12: #{forward.5} parent=0 // pred_region
    _
  $region13: #{forward.5} parent=0 // pred_fallthru
    _
  %v15 = vld [vmem:[%s0] sm:$0xf]
  %v16 = vld [vmem:[%s0 + $0x4] sm:$0xf]
  %v17 = vld [vmem:[%s0 + $0x8] sm:$0xf]
  %v18 = vld [vmem:[%s1] sm:$0xf]
  %v19 = vld [vmem:[%s1 + $0x4] sm:$0xf]
  %v20 = vld [vmem:[%s1 + $0x8] sm:$0xf]
  %v21 = vld [vmem:[%s1 + $0xc] sm:$0xf]
  %v22 = vld [vmem:[%s1 + $0x10] sm:$0xf]
  %v23 = vld [vmem:[%s1 + $0x14] sm:$0xf]
  %v24 = vld [vmem:[%s1 + $0x18] sm:$0xf]
  %v25 = vld [vmem:[%s1 + $0x1c] sm:$0xf]
  %v26 = vld [vmem:[%s1 + $0x20] sm:$0xf]
  %v27 = vld [vmem:[%s1 + $0x24] sm:$0xf]
  %v28 = vld [vmem:[%s1 + $0x28] sm:$0xf]
  %v29 = vld [vmem:[%s1 + $0x2c] sm:$0xf]
  %v30 = vld [vmem:[%s1 + $0x30] sm:$0xf]
  %v31 = vld [vmem:[%s1 + $0x34] sm:$0xf]
  %v32 = vld [vmem:[%s1 + $0x38] sm:$0xf]
  %v33 = vld [vmem:[%s1 + $0x3c] sm:$0xf]
  %v34 = vld [vmem:[%s2] sm:$0x1]
  %v36 = vlaneseq
  %v37 = vshrl.u32 %v36, 7
  %v38 = vsub.s32 0, %v37
  %v39 = vrot.slane %v34, %v38
  %v44 = vunpack.c.l.b16 %v15
  %v45 = vunpack.c.l.b16 %v16
  %v46 = vunpack.c.l.b16 %v17
  %v47 = vpack.c.b16 %v45, %v44
  %v48 = vpack.c.b16 %v46, %v46
  %v67 = vunpack.c.l.b16 %v18
  %v68 = vunpack.c.l.b16 %v19
  %v69 = vunpack.c.l.b16 %v20
  %v70 = vunpack.c.l.b16 %v21
  %v71 = vunpack.c.l.b16 %v22
  %v72 = vunpack.c.l.b16 %v23
  %v73 = vunpack.c.l.b16 %v24
  %v74 = vunpack.c.l.b16 %v25
  %v75 = vunpack.c.l.b16 %v26
  %v76 = vunpack.c.l.b16 %v27
  %v77 = vunpack.c.l.b16 %v28
  %v78 = vunpack.c.l.b16 %v29
  %v79 = vunpack.c.l.b16 %v30
  %v80 = vunpack.c.l.b16 %v31
  %v81 = vunpack.c.l.b16 %v32
  %v82 = vunpack.c.l.b16 %v33
  %v83 = vpack.c.b16 %v68, %v67
  %v84 = vpack.c.b16 %v70, %v69
  %v85 = vpack.c.b16 %v72, %v71
  %v86 = vpack.c.b16 %v74, %v73
  %v87 = vpack.c.b16 %v76, %v75
  %v88 = vpack.c.b16 %v78, %v77
  %v89 = vpack.c.b16 %v80, %v79
  %v90 = vpack.c.b16 %v82, %v81
  %99 = vmatprep.subr.bf16.mxu0 0
  %100 = vmatpush1.bf16.msra.mxu0 %v90
  %101 = vmatprep.subr.bf16.mxu0 0
  %102 = vmatpush1.bf16.msra.mxu0 %v89
  %103 = vmatprep.subr.bf16.mxu0 0
  %104 = vmatpush1.bf16.msra.mxu0 %v88
  %105 = vmatprep.subr.bf16.mxu0 0
  %106 = vmatpush1.bf16.msra.mxu0 %v87
  %107 = vmatprep.subr.bf16.mxu0 0
  %108 = vmatpush1.bf16.msra.mxu0 %v86
  %109 = vmatprep.subr.bf16.mxu0 0
  %110 = vmatpush1.bf16.msra.mxu0 %v85
  %111 = vmatprep.subr.bf16.mxu0 0
  %112 = vmatpush1.bf16.msra.mxu0 %v84
  %113 = vmatprep.subr.bf16.mxu0 0
  %114 = vmatpush1.bf16.msra.mxu0 %v83
  %115 = vmatprep.subr.bf16.mxu0 0
  %116 = vmatpush2.bf16.msra.mxu0 0
  %117 = vmatprep.subr.bf16.mxu0 0
  %118 = vmatpush2.bf16.msra.mxu0 0
  %119 = vmatprep.subr.bf16.mxu0 0
  %120 = vmatpush2.bf16.msra.mxu0 0
  %121 = vmatprep.subr.bf16.mxu0 0
  %122 = vmatpush2.bf16.msra.mxu0 0
  %123 = vmatprep.subr.bf16.mxu0 0
  %124 = vmatpush2.bf16.msra.mxu0 0
  %125 = vmatprep.subr.bf16.mxu0 0
  %126 = vmatpush2.bf16.msra.mxu0 0
  %127 = vmatprep.subr.bf16.mxu0 0
  %128 = vmatpush2.bf16.msra.mxu0 0
  %129 = vmatprep.subr.bf16.mxu0 0
  %130 = vmatpush2.bf16.msra.mxu0 0
  %131 = vmatprep.mubr.bf16.mxu0 0
  %132 = vmatmul.mubr.bf16.gmra.mxu0 %v47
  %v133 = vpop.f32.mrf.mxu0
  %v134 = vadd.f32 %v39, %v133
  %v135 = vpop.f32.mrf.mxu0
  %v136 = vpop.f32.mrf.mxu0
  %v137 = vadd.f32 %v39, %v136
  %v138 = vpop.f32.mrf.mxu0
  %139 = vmatprep.mubr.bf16.mxu0 0
  %140 = vmatmul.mubr.bf16.gmra.mxu0 %v48
  %v141 = vpop.f32.mrf.mxu0
  %v142 = vadd.f32 %v39, %v141
  %v143 = vpop.f32.mrf.mxu0
  %v144 = vpop.f32.mrf.mxu0
  %v145 = vpop.f32.mrf.mxu0
  %146 = vdwg.mxu0
  %v147 = vmax.f32 %v134, 0.0
  %v148 = vmax.f32 %v137, 0.0
  %v149 = vmax.f32 %v142, 0.0
  %v150 = vpack.c.bf16 %v148, %v147
  %v151 = vpack.c.bf16 %v149, %v149
  %v154 = vunpack.c.l.b16 %v150
  %v155 = vunpack.c.h.b16 %v150
  %v156 = vunpack.c.l.b16 %v151
  %v157 = vpack.c.b16 %v154, %v154
  %v158 = vpack.c.b16 %v155, %v155
  %v159 = vpack.c.b16 %v156, %v156
  %vm163 = vcmask 60416
  %164 = vst.msk [vmem:[%s3] sm:$0xf] %vm163, %v157
  %165 = vst.msk [vmem:[%s3 + $0x4] sm:$0xf] %vm163, %v158
  %166 = vst.msk [vmem:[%s3 + $0x8] sm:$0xf] %vm163, %v159
  // Predicated region
  $region14: #{forward.5} parent=0 // pred_check
    _
  $region15: #{forward.5} parent=0 // pred_check_branch
    %168 = sbr.rel (0) target = $region17
  $region16: #{forward.5} parent=0 // pred_region
    _
  $region17: #{forward.5} parent=0 // pred_fallthru
    _
  // Predicated region
  $region18: #{forward.5} parent=0 // pred_check
    _
  $region19: #{forward.5} parent=0 // pred_check_branch
    %170 = sbr.rel (0) target = $region21
  $region20: #{forward.5} parent=0 // pred_region
    _
  $region21: #{forward.5} parent=0 // pred_fallthru
    _

// kernel: forward.7
$region0: #{forward.7}
  #allocation0 [shape = 'u32[]', space=smem, size = 0x4, offset = 0x4, fixed_abs, tag = 'smem constant byte address 0x4 - core index']
  #allocation1 [shape = 'u32[144,128]{1,0:T(1,128)}', space=vmem, size = 0x12000, scoped, tag = 'internal scratch']
  %s0 = inlined_call_operand.vmem [shape: f32[2,16], index: 0, kind: input, shape index: {}]
  %s1 = inlined_call_operand.vmem [shape: f32[2,32], index: 1, kind: input, shape index: {}]
  %s2 = inlined_call_operand.vmem [shape: f32[2,1], index: 2, kind: input, shape index: {}]
  %s3 = inlined_call_operand.vmem [shape: f32[16,32], index: 3, kind: input, shape index: {}]
  %s4 = inlined_call_operand.vmem [shape: f32[1,32], index: 4, kind: input, shape index: {}]
  %s5 = inlined_call_operand.vmem [shape: f32[32,96], index: 5, kind: input, shape index: {}]
  %s6 = inlined_call_operand.vmem [shape: f32[32,96], index: 6, kind: input, shape index: {}]
  %s7 = inlined_call_operand.vmem [shape: f32[1,96], index: 7, kind: input, shape index: {}]
  %s8 = inlined_call_operand.vmem [shape: f32[1,96], index: 8, kind: input, shape index: {}]
  %s9 = inlined_call_operand.vmem [shape: f32[32,128], index: 9, kind: input, shape index: {}]
  %s10 = inlined_call_operand.vmem [shape: f32[1,128], index: 10, kind: input, shape index: {}]
  %s11 = inlined_call_operand.hbm [shape: f32[2,32], index: 11, kind: output, shape index: {0}]
  %s12 = inlined_call_operand.vmem [shape: f32[2,128], index: 12, kind: output, shape index: {1}]
  %13 = xla_tuple %s11, %s12
  %s14 = sld [smem:[#allocation0]]
  $region62: #{forward.7} parent=0
    _
  %s16 = ssub.s32 1, %s14
  %s17 = scalar_select 0, %s16, %s14
  $region1: #{forward.7} parent=0
    #allocation2 [shape = 'u8[1024]{0}', space=vmem, size = 0x400, scoped, tag = 'output window, operand 0, single buffered']
    #allocation3 [shape = 's32[1]{0}', space=sflag, size = 0x4, scoped, tag = 'scoped memory for forward.7']
    %18 = vsyncpa [#allocation3], 0
    // Predicated region
    $region2: #{forward.7} parent=1 // pred_check
      _
    $region3: #{forward.7} parent=1 // pred_check_branch
      %20 = sbr.rel (0) target = $region5
    $region4: #{forward.7} parent=1 // pred_region
      _
    $region5: #{forward.7} parent=1 // pred_fallthru
      _
    // Predicated region
    $region6: #{forward.7} parent=1 // pred_check
      _
    $region7: #{forward.7} parent=1 // pred_check_branch
      %22 = sbr.rel (0) target = $region9
    $region8: #{forward.7} parent=1 // pred_region
      _
    $region9: #{forward.7} parent=1 // pred_fallthru
      _
    // Predicated region
    $region10: #{forward.7} parent=1 // pred_check
      _
    $region11: #{forward.7} parent=1 // pred_check_branch
      %24 = sbr.rel (0) target = $region13
    $region12: #{forward.7} parent=1 // pred_region
      _
    $region13: #{forward.7} parent=1 // pred_fallthru
      _
    // Predicated region
    $region14: #{forward.7} parent=1 // pred_check
      _
    $region15: #{forward.7} parent=1 // pred_check_branch
      %26 = sbr.rel (0) target = $region17
    $region16: #{forward.7} parent=1 // pred_region
      _
    $region17: #{forward.7} parent=1 // pred_fallthru
      _
    // Predicated region
    $region18: #{forward.7} parent=1 // pred_check
      _
    $region19: #{forward.7} parent=1 // pred_check_branch
      %28 = sbr.rel (0) target = $region21
    $region20: #{forward.7} parent=1 // pred_region
      _
    $region21: #{forward.7} parent=1 // pred_fallthru
      _
    // Predicated region
    $region22: #{forward.7} parent=1 // pred_check
      _
    $region23: #{forward.7} parent=1 // pred_check_branch
      %30 = sbr.rel (0) target = $region25
    $region24: #{forward.7} parent=1 // pred_region
      _
    $region25: #{forward.7} parent=1 // pred_fallthru
      _
    // Predicated region
    $region26: #{forward.7} parent=1 // pred_check
      _
    $region27: #{forward.7} parent=1 // pred_check_branch
      %32 = sbr.rel (0) target = $region29
    $region28: #{forward.7} parent=1 // pred_region
      _
    $region29: #{forward.7} parent=1 // pred_fallthru
      _
    // Predicated region
    $region30: #{forward.7} parent=1 // pred_check
      _
    $region31: #{forward.7} parent=1 // pred_check_branch
      %34 = sbr.rel (0) target = $region33
    $region32: #{forward.7} parent=1 // pred_region
      _
    $region33: #{forward.7} parent=1 // pred_fallthru
      _
    // Predicated region
    $region34: #{forward.7} parent=1 // pred_check
      _
    $region35: #{forward.7} parent=1 // pred_check_branch
      %36 = sbr.rel (0) target = $region37
    $region36: #{forward.7} parent=1 // pred_region
      _
    $region37: #{forward.7} parent=1 // pred_fallthru
      _
    // Predicated region
    $region38: #{forward.7} parent=1 // pred_check
      _
    $region39: #{forward.7} parent=1 // pred_check_branch
      %38 = sbr.rel (0) target = $region41
    $region40: #{forward.7} parent=1 // pred_region
      _
    $region41: #{forward.7} parent=1 // pred_fallthru
      _
    // Predicated region
    $region42: #{forward.7} parent=1 // pred_check
      _
    $region43: #{forward.7} parent=1 // pred_check_branch
      %40 = sbr.rel (0) target = $region45
    $region44: #{forward.7} parent=1 // pred_region
      _
    $region45: #{forward.7} parent=1 // pred_fallthru
      _
    %v41 = vld [vmem:[%s0] sm:$0x3]
    %v42 = vld [vmem:[%s3] sm:$0xff]
    %v43 = vld [vmem:[%s3 + $0x8] sm:$0xff]
    %v44 = vld [vmem:[%s4] sm:$0x1]
    %v46 = vlaneseq
    %v47 = vshrl.u32 %v46, 7
    %v48 = vsub.s32 0, %v47
    %v49 = vrot.slane %v44, %v48
    %vm51 = vcmask 130048
    %v53 = vsel %vm51, %v41, 0
    %55 = vmatprep.subr.mxu0 0.0
    %56 = vmatpush1.msra.mxu0 0.0
    %57 = vmatprep.subr.mxu0 0.0
    %58 = vmatpush1.msra.mxu0 0.0
    %59 = vmatprep.subr.mxu0 0.0
    %60 = vmatpush1.msra.mxu0 0.0
    %61 = vmatprep.subr.mxu0 0.0
    %62 = vmatpush1.msra.mxu0 0.0
    %63 = vmatprep.subr.mxu0 0.0
    %64 = vmatpush1.msra.mxu0 0.0
    %65 = vmatprep.subr.mxu0 0.0
    %66 = vmatpush1.msra.mxu0 0.0
    %67 = vmatprep.subr.mxu0 0.0
    %68 = vmatpush1.msra.mxu0 0.0
    %69 = vmatprep.subr.mxu0 0.0
    %70 = vmatpush1.msra.mxu0 0.0
    %71 = vmatprep.subr.mxu0 0.0
    %72 = vmatpush1.msra.mxu0 0.0
    %73 = vmatprep.subr.mxu0 0.0
    %74 = vmatpush1.msra.mxu0 0.0
    %75 = vmatprep.subr.mxu0 0.0
    %76 = vmatpush1.msra.mxu0 0.0
    %77 = vmatprep.subr.mxu0 0.0
    %78 = vmatpush1.msra.mxu0 0.0
    %79 = vmatprep.subr.mxu0 0.0
    %80 = vmatpush1.msra.mxu0 0.0
    %81 = vmatprep.subr.mxu0 0.0
    %82 = vmatpush1.msra.mxu0 0.0
    %83 = vmatprep.subr.mxu0 0.0
    %84 = vmatpush1.msra.mxu0 %v43
    %85 = vmatprep.subr.mxu0 0.0
    %86 = vmatpush1.msra.mxu0 %v42
    %87 = vmatprep.subr.mxu0 0.0
    %88 = vmatpush2.msra.mxu0 0.0
    %89 = vmatprep.subr.mxu0 0.0
    %90 = vmatpush2.msra.mxu0 0.0
    %91 = vmatprep.subr.mxu0 0.0
    %92 = vmatpush2.msra.mxu0 0.0
    %93 = vmatprep.subr.mxu0 0.0
    %94 = vmatpush2.msra.mxu0 0.0
    %95 = vmatprep.subr.mxu0 0.0
    %96 = vmatpush2.msra.mxu0 0.0
    %97 = vmatprep.subr.mxu0 0.0
    %98 = vmatpush2.msra.mxu0 0.0
    %99 = vmatprep.subr.mxu0 0.0
    %100 = vmatpush2.msra.mxu0 0.0
    %101 = vmatprep.subr.mxu0 0.0
    %102 = vmatpush2.msra.mxu0 0.0
    %103 = vmatprep.subr.mxu0 0.0
    %104 = vmatpush2.msra.mxu0 0.0
    %105 = vmatprep.subr.mxu0 0.0
    %106 = vmatpush2.msra.mxu0 0.0
    %107 = vmatprep.subr.mxu0 0.0
    %108 = vmatpush2.msra.mxu0 0.0
    %109 = vmatprep.subr.mxu0 0.0
    %110 = vmatpush2.msra.mxu0 0.0
    %111 = vmatprep.subr.mxu0 0.0
    %112 = vmatpush2.msra.mxu0 0.0
    %113 = vmatprep.subr.mxu0 0.0
    %114 = vmatpush2.msra.mxu0 0.0
    %115 = vmatprep.subr.mxu0 0.0
    %116 = vmatpush2.msra.mxu0 0.0
    %117 = vmatprep.subr.mxu0 0.0
    %118 = vmatpush2.msra.mxu0 0.0
    %119 = vmatprep.mubr.f32.mxu0 0.0
    %120 = vmatmul.mubr.f32.gmra.mxu0 %v53
    %v121 = vpop.f32.mrf.mxu0
    %v122 = vadd.f32 %v49, %v121
    %v123 = vpop.f32.mrf.mxu0
    %124 = vdwg.mxu0
    %v125 = vmax.f32 %v122, 0.0
    %v126 = vld [vmem:[%s1] sm:$0x3]
    %v127 = vld [vmem:[%s2] sm:$0x3]
    %129 = vset.pattern.permute.xlu0 0
    %130 = vperm.xlu0 %129, %v127
    %v131 = vpop.permute.xlu0 %130
    %v133 = vmul.f32 %v126, %v131
    %v134 = vld [vmem:[%s5] sm:$0xff]
    %v135 = vld [vmem:[%s5 + $0x8] sm:$0xff]
    %v136 = vld [vmem:[%s5 + $0x10] sm:$0xff]
    %v137 = vld [vmem:[%s5 + $0x18] sm:$0xff]
    %v138 = vld [vmem:[%s7] sm:$0x1]
    %v140 = vlaneseq
    %v141 = vshrl.u32 %v140, 7
    %v142 = vsub.s32 0, %v141
    %v143 = vrot.slane %v138, %v142
    %vm145 = vcmask 261120
    %v147 = vsel %vm145, %v125, 0
    %149 = vmatprep.subr.mxu0 0.0
    %150 = vmatpush1.msra.mxu0 0.0
    %151 = vmatprep.subr.mxu0 0.0
    %152 = vmatpush1.msra.mxu0 0.0
    %153 = vmatprep.subr.mxu0 0.0
    %154 = vmatpush1.msra.mxu0 0.0
    %155 = vmatprep.subr.mxu0 0.0
    %156 = vmatpush1.msra.mxu0 0.0
    %157 = vmatprep.subr.mxu0 0.0
    %158 = vmatpush1.msra.mxu0 0.0
    %159 = vmatprep.subr.mxu0 0.0
    %160 = vmatpush1.msra.mxu0 0.0
    %161 = vmatprep.subr.mxu0 0.0
    %162 = vmatpush1.msra.mxu0 0.0
    %163 = vmatprep.subr.mxu0 0.0
    %164 = vmatpush1.msra.mxu0 0.0
    %165 = vmatprep.subr.mxu0 0.0
    %166 = vmatpush1.msra.mxu0 0.0
    %167 = vmatprep.subr.mxu0 0.0
    %168 = vmatpush1.msra.mxu0 0.0
    %169 = vmatprep.subr.mxu0 0.0
    %170 = vmatpush1.msra.mxu0 0.0
    %171 = vmatprep.subr.mxu0 0.0
    %172 = vmatpush1.msra.mxu0 0.0
    %173 = vmatprep.subr.mxu0 0.0
    %174 = vmatpush1.msra.mxu0 %v137
    %175 = vmatprep.subr.mxu0 0.0
    %176 = vmatpush1.msra.mxu0 %v136
    %177 = vmatprep.subr.mxu0 0.0
    %178 = vmatpush1.msra.mxu0 %v135
    %179 = vmatprep.subr.mxu0 0.0
    %180 = vmatpush1.msra.mxu0 %v134
    %181 = vmatprep.subr.mxu0 0.0
    %182 = vmatpush2.msra.mxu0 0.0
    %183 = vmatprep.subr.mxu0 0.0
    %184 = vmatpush2.msra.mxu0 0.0
    %185 = vmatprep.subr.mxu0 0.0
    %186 = vmatpush2.msra.mxu0 0.0
    %187 = vmatprep.subr.mxu0 0.0
    %188 = vmatpush2.msra.mxu0 0.0
    %189 = vmatprep.subr.mxu0 0.0
    %190 = vmatpush2.msra.mxu0 0.0
    %191 = vmatprep.subr.mxu0 0.0
    %192 = vmatpush2.msra.mxu0 0.0
    %193 = vmatprep.subr.mxu0 0.0
    %194 = vmatpush2.msra.mxu0 0.0
    %195 = vmatprep.subr.mxu0 0.0
    %196 = vmatpush2.msra.mxu0 0.0
    %197 = vmatprep.subr.mxu0 0.0
    %198 = vmatpush2.msra.mxu0 0.0
    %199 = vmatprep.subr.mxu0 0.0
    %200 = vmatpush2.msra.mxu0 0.0
    %201 = vmatprep.subr.mxu0 0.0
    %202 = vmatpush2.msra.mxu0 0.0
    %203 = vmatprep.subr.mxu0 0.0
    %204 = vmatpush2.msra.mxu0 0.0
    %205 = vmatprep.subr.mxu0 0.0
    %206 = vmatpush2.msra.mxu0 0.0
    %207 = vmatprep.subr.mxu0 0.0
    %208 = vmatpush2.msra.mxu0 0.0
    %209 = vmatprep.subr.mxu0 0.0
    %210 = vmatpush2.msra.mxu0 0.0
    %211 = vmatprep.subr.mxu0 0.0
    %212 = vmatpush2.msra.mxu0 0.0
    %213 = vmatprep.mubr.f32.mxu0 0.0
    %214 = vmatmul.mubr.f32.gmra.mxu0 %v147
    %v215 = vpop.f32.mrf.mxu0
    %v216 = vadd.f32 %v143, %v215
    %v217 = vpop.f32.mrf.mxu0
    %218 = vdwg.mxu0
    %v219 = vld [vmem:[%s6] sm:$0xff]
    %v220 = vld [vmem:[%s6 + $0x8] sm:$0xff]
    %v221 = vld [vmem:[%s6 + $0x10] sm:$0xff]
    %v222 = vld [vmem:[%s6 + $0x18] sm:$0xff]
    %v223 = vld [vmem:[%s8] sm:$0x1]
    %v225 = vlaneseq
    %v226 = vshrl.u32 %v225, 7
    %v227 = vsub.s32 0, %v226
    %v228 = vrot.slane %v223, %v227
    %v231 = vsel %vm145, %v133, 0
    %233 = vmatprep.subr.mxu0 0.0
    %234 = vmatpush1.msra.mxu0 0.0
    %235 = vmatprep.subr.mxu0 0.0
    %236 = vmatpush1.msra.mxu0 0.0
    %237 = vmatprep.subr.mxu0 0.0
    %238 = vmatpush1.msra.mxu0 0.0
    %239 = vmatprep.subr.mxu0 0.0
    %240 = vmatpush1.msra.mxu0 0.0
    %241 = vmatprep.subr.mxu0 0.0
    %242 = vmatpush1.msra.mxu0 0.0
    %243 = vmatprep.subr.mxu0 0.0
    %244 = vmatpush1.msra.mxu0 0.0
    %245 = vmatprep.subr.mxu0 0.0
    %246 = vmatpush1.msra.mxu0 0.0
    %247 = vmatprep.subr.mxu0 0.0
    %248 = vmatpush1.msra.mxu0 0.0
    %249 = vmatprep.subr.mxu0 0.0
    %250 = vmatpush1.msra.mxu0 0.0
    %251 = vmatprep.subr.mxu0 0.0
    %252 = vmatpush1.msra.mxu0 0.0
    %253 = vmatprep.subr.mxu0 0.0
    %254 = vmatpush1.msra.mxu0 0.0
    %255 = vmatprep.subr.mxu0 0.0
    %256 = vmatpush1.msra.mxu0 0.0
    %257 = vmatprep.subr.mxu0 0.0
    %258 = vmatpush1.msra.mxu0 %v222
    %259 = vmatprep.subr.mxu0 0.0
    %260 = vmatpush1.msra.mxu0 %v221
    %261 = vmatprep.subr.mxu0 0.0
    %262 = vmatpush1.msra.mxu0 %v220
    %263 = vmatprep.subr.mxu0 0.0
    %264 = vmatpush1.msra.mxu0 %v219
    %265 = vmatprep.subr.mxu0 0.0
    %266 = vmatpush2.msra.mxu0 0.0
    %267 = vmatprep.subr.mxu0 0.0
    %268 = vmatpush2.msra.mxu0 0.0
    %269 = vmatprep.subr.mxu0 0.0
    %270 = vmatpush2.msra.mxu0 0.0
    %271 = vmatprep.subr.mxu0 0.0
    %272 = vmatpush2.msra.mxu0 0.0
    %273 = vmatprep.subr.mxu0 0.0
    %274 = vmatpush2.msra.mxu0 0.0
    %275 = vmatprep.subr.mxu0 0.0
    %276 = vmatpush2.msra.mxu0 0.0
    %277 = vmatprep.subr.mxu0 0.0
    %278 = vmatpush2.msra.mxu0 0.0
    %279 = vmatprep.subr.mxu0 0.0
    %280 = vmatpush2.msra.mxu0 0.0
    %281 = vmatprep.subr.mxu0 0.0
    %282 = vmatpush2.msra.mxu0 0.0
    %283 = vmatprep.subr.mxu0 0.0
    %284 = vmatpush2.msra.mxu0 0.0
    %285 = vmatprep.subr.mxu0 0.0
    %286 = vmatpush2.msra.mxu0 0.0
    %287 = vmatprep.subr.mxu0 0.0
    %288 = vmatpush2.msra.mxu0 0.0
    %289 = vmatprep.subr.mxu0 0.0
    %290 = vmatpush2.msra.mxu0 0.0
    %291 = vmatprep.subr.mxu0 0.0
    %292 = vmatpush2.msra.mxu0 0.0
    %293 = vmatprep.subr.mxu0 0.0
    %294 = vmatpush2.msra.mxu0 0.0
    %295 = vmatprep.subr.mxu0 0.0
    %296 = vmatpush2.msra.mxu0 0.0
    %297 = vmatprep.mubr.f32.mxu0 0.0
    %298 = vmatmul.mubr.f32.gmra.mxu0 %v231
    %v299 = vpop.f32.mrf.mxu0
    %v300 = vadd.f32 %v228, %v299
    %v301 = vpop.f32.mrf.mxu0
    %302 = vdwg.mxu0
    %v303 = vadd.f32 %v216, %v300
    %v304 = vxor.u32 %v303, 2147483648
    %v305 = vmul.f32 %v304, 1.442695
    %v306 = vpow.pop %v305
    %v307 = vadd.f32 %v306, 1.0
    %v308 = vrcp.pop %v307
    %v309 = vmul.f32 1.0, %v308
    %311 = vrot.lane.b32.xlu0 %v300, 64
    %v312 = vpop.permute.xlu0 %311
    %v314 = vmul.f32 %v309, %v312
    %316 = vrot.lane.b32.xlu0 %v314, 64
    %v317 = vpop.permute.xlu0 %316
    %v319 = vadd.f32 %v216, %v317
    %v320 = vtanh.pop %v319
    %v321 = vsub.f32 1.0, %v309
    %323 = vrot.lane.b32.xlu0 %v320, 96
    %v324 = vpop.permute.xlu0 %323
    %v326 = vmul.f32 %v321, %v324
    %327 = vrot.lane.b32.xlu0 %v133, 32
    %v328 = vpop.permute.xlu0 %327
    %v330 = vmul.f32 %v309, %v328
    %v331 = vadd.f32 %v326, %v330
    %333 = vrot.lane.b32.xlu0 %v331, 96
    %v334 = vpop.permute.xlu0 %333
    %vm336 = vcmask 254976
    %337 = vst.msk [vmem:[#allocation2] sm:$0x3] %vm336, %v334
    %v338 = vld [vmem:[%s9] sm:$0xff]
    %v339 = vld [vmem:[%s9 + $0x8] sm:$0xff]
    %v340 = vld [vmem:[%s9 + $0x10] sm:$0xff]
    %v341 = vld [vmem:[%s9 + $0x18] sm:$0xff]
    %v342 = vld [vmem:[%s10] sm:$0x1]
    %v344 = vlaneseq
    %v345 = vshrl.u32 %v344, 7
    %v346 = vsub.s32 0, %v345
    %v347 = vrot.slane %v342, %v346
    %v349 = vsel %vm145, %v334, 0
    %351 = vmatprep.subr.mxu0 0.0
    %352 = vmatpush1.msra.mxu0 0.0
    %353 = vmatprep.subr.mxu0 0.0
    %354 = vmatpush1.msra.mxu0 0.0
    %355 = vmatprep.subr.mxu0 0.0
    %356 = vmatpush1.msra.mxu0 0.0
    %357 = vmatprep.subr.mxu0 0.0
    %358 = vmatpush1.msra.mxu0 0.0
    %359 = vmatprep.subr.mxu0 0.0
    %360 = vmatpush1.msra.mxu0 0.0
    %361 = vmatprep.subr.mxu0 0.0
    %362 = vmatpush1.msra.mxu0 0.0
    %363 = vmatprep.subr.mxu0 0.0
    %364 = vmatpush1.msra.mxu0 0.0
    %365 = vmatprep.subr.mxu0 0.0
    %366 = vmatpush1.msra.mxu0 0.0
    %367 = vmatprep.subr.mxu0 0.0
    %368 = vmatpush1.msra.mxu0 0.0
    %369 = vmatprep.subr.mxu0 0.0
    %370 = vmatpush1.msra.mxu0 0.0
    %371 = vmatprep.subr.mxu0 0.0
    %372 = vmatpush1.msra.mxu0 0.0
    %373 = vmatprep.subr.mxu0 0.0
    %374 = vmatpush1.msra.mxu0 0.0
    %375 = vmatprep.subr.mxu0 0.0
    %376 = vmatpush1.msra.mxu0 %v341
    %377 = vmatprep.subr.mxu0 0.0
    %378 = vmatpush1.msra.mxu0 %v340
    %379 = vmatprep.subr.mxu0 0.0
    %380 = vmatpush1.msra.mxu0 %v339
    %381 = vmatprep.subr.mxu0 0.0
    %382 = vmatpush1.msra.mxu0 %v338
    %383 = vmatprep.subr.mxu0 0.0
    %384 = vmatpush2.msra.mxu0 0.0
    %385 = vmatprep.subr.mxu0 0.0
    %386 = vmatpush2.msra.mxu0 0.0
    %387 = vmatprep.subr.mxu0 0.0
    %388 = vmatpush2.msra.mxu0 0.0
    %389 = vmatprep.subr.mxu0 0.0
    %390 = vmatpush2.msra.mxu0 0.0
    %391 = vmatprep.subr.mxu0 0.0
    %392 = vmatpush2.msra.mxu0 0.0
    %393 = vmatprep.subr.mxu0 0.0
    %394 = vmatpush2.msra.mxu0 0.0
    %395 = vmatprep.subr.mxu0 0.0
    %396 = vmatpush2.msra.mxu0 0.0
    %397 = vmatprep.subr.mxu0 0.0
    %398 = vmatpush2.msra.mxu0 0.0
    %399 = vmatprep.subr.mxu0 0.0
    %400 = vmatpush2.msra.mxu0 0.0
    %401 = vmatprep.subr.mxu0 0.0
    %402 = vmatpush2.msra.mxu0 0.0
    %403 = vmatprep.subr.mxu0 0.0
    %404 = vmatpush2.msra.mxu0 0.0
    %405 = vmatprep.subr.mxu0 0.0
    %406 = vmatpush2.msra.mxu0 0.0
    %407 = vmatprep.subr.mxu0 0.0
    %408 = vmatpush2.msra.mxu0 0.0
    %409 = vmatprep.subr.mxu0 0.0
    %410 = vmatpush2.msra.mxu0 0.0
    %411 = vmatprep.subr.mxu0 0.0
    %412 = vmatpush2.msra.mxu0 0.0
    %413 = vmatprep.subr.mxu0 0.0
    %414 = vmatpush2.msra.mxu0 0.0
    %415 = vmatprep.mubr.f32.mxu0 0.0
    %416 = vmatmul.mubr.f32.gmra.mxu0 %v349
    %v417 = vpop.f32.mrf.mxu0
    %v418 = vadd.f32 %v347, %v417
    %v419 = vpop.f32.mrf.mxu0
    %420 = vdwg.mxu0
    %v421 = vlaneseq
    %v422 = vand.u32 %v421, 127
    %vm423 = vcmp.lt.s32.totalorder %v422, 6
    %vm424 = vcmp.eq.s32.totalorder %v422, 6
    %vm425 = vcmp.eq.s32.totalorder %v422, 7
    %v426 = vsel %vm423, %v418, -inf
    %vm427 = vcmask 1041408
    %v428 = vsel %vm427, %v426, -inf
    %429 = vmax.xlane.f32.xlu0 %v428
    %v430 = vpop.xlane.xlu0 %429
    %v431 = vsub.f32 %v418, %v430
    %v432 = vmul.f32 %v431, 1.442695
    %v433 = vpow.pop %v432
    %v434 = vsel %vm423, %v433, 0.0
    %v435 = vsel %vm427, %v434, 0.0
    %436 = vadd.xlane.f32.xlu0 %v435
    %v437 = vpop.xlane.xlu0 %436
    %v438 = vlog2.pop %v437
    %v439 = vmul.f32 %v438, 0.6931472
    %v440 = vadd.f32 %v430, %v439
    %v441 = vsub.f32 %v418, %v440
    %v442 = vrcp.pop %v437
    %v443 = vmul.f32 %v434, %v441
    %v444 = vsel %vm423, %v443, 0.0
    %v445 = vsel %vm427, %v444, 0.0
    %446 = vadd.xlane.f32.xlu0 %v445
    %v447 = vpop.xlane.xlu0 %446
    %v448 = vsub.f32 0.0, %v447
    %v449 = vmul.f32 %v448, %v442
    %v450 = vsel %vm423, %v441, 0.0
    %v451 = vsel %vm424, %v418, 0.0
    %v452 = vadd.f32 %v450, %v451
    %v453 = vsel %vm425, %v449, 0.0
    %v454 = vadd.f32 %v452, %v453
    %455 = vst [vmem:[%s12] sm:$0x3] %v454
    // Predicated region
    $region46: #{forward.7} parent=1 // pred_check
      _
    $region47: #{forward.7} parent=1 // pred_check_branch
      %457 = sbr.rel (0) target = $region49
    $region48: #{forward.7} parent=1 // pred_region
      %s459 = ssub.s32 32, 32
      %460 = vsyncadd [#allocation3], %s459
      %s462 = sshll.u32 [#allocation2], 4
      %s463 = int_to_ptr.vmem [resolvable:$true] %s462
      %465 = dma.vmem_to_hbm [thread:$0]  %s463, 32, %s11, [#allocation3]
    $region49: #{forward.7} parent=1 // pred_fallthru
      _
    // Predicated region
    $region50: #{forward.7} parent=1 // pred_check
      _
    $region51: #{forward.7} parent=1 // pred_check_branch
      %467 = sbr.rel (0) target = $region53
    $region52: #{forward.7} parent=1 // pred_region
      _
    $region53: #{forward.7} parent=1 // pred_fallthru
      _
    // Predicated region
    $region54: #{forward.7} parent=1 // pred_check
      _
    $region55: #{forward.7} parent=1 // pred_check_branch
      %469 = sbr.rel (0) target = $region57
    $region56: #{forward.7} parent=1 // pred_region
      %470 = dma.done [#allocation3], 32
    $region57: #{forward.7} parent=1 // pred_fallthru
      _
    // Predicated region
    $region58: #{forward.7} parent=1 // pred_check
      _
    $region59: #{forward.7} parent=1 // pred_check_branch
      %472 = sbr.rel (0) target = $region61
    $region60: #{forward.7} parent=1 // pred_region
      _
    $region61: #{forward.7} parent=1 // pred_fallthru
      _
    %473 = vsyncpa [#allocation3], 1

// kernel: forward.6
$region0: #{forward.6}
  #allocation0 [shape = 'u32[]', space=smem, size = 0x4, offset = 0x4, fixed_abs, tag = 'smem constant byte address 0x4 - core index']
  #allocation1 [shape = 'u32[144,128]{1,0:T(1,128)}', space=vmem, size = 0x12000, scoped, tag = 'internal scratch']
  %s0 = inlined_call_operand.vmem [shape: bf16[8,72], index: 0, kind: input, shape index: {}]
  %s1 = inlined_call_operand.vmem [shape: bf16[72,16], index: 1, kind: input, shape index: {}]
  %s2 = inlined_call_operand.vmem [shape: f32[1,16], index: 2, kind: input, shape index: {}]
  %s3 = inlined_call_operand.vmem [shape: f32[8,16], index: 3, kind: output, shape index: {}]
  %s4 = sld [smem:[#allocation0]]
  $region22: #{forward.6} parent=0
    _
  %s6 = ssub.s32 1, %s4
  %s7 = scalar_select 0, %s6, %s4
  // Predicated region
  $region2: #{forward.6} parent=0 // pred_check
    _
  $region3: #{forward.6} parent=0 // pred_check_branch
    %9 = sbr.rel (0) target = $region5
  $region4: #{forward.6} parent=0 // pred_region
    _
  $region5: #{forward.6} parent=0 // pred_fallthru
    _
  // Predicated region
  $region6: #{forward.6} parent=0 // pred_check
    _
  $region7: #{forward.6} parent=0 // pred_check_branch
    %11 = sbr.rel (0) target = $region9
  $region8: #{forward.6} parent=0 // pred_region
    _
  $region9: #{forward.6} parent=0 // pred_fallthru
    _
  // Predicated region
  $region10: #{forward.6} parent=0 // pred_check
    _
  $region11: #{forward.6} parent=0 // pred_check_branch
    %13 = sbr.rel (0) target = $region13
  $region12: #{forward.6} parent=0 // pred_region
    _
  $region13: #{forward.6} parent=0 // pred_fallthru
    _
  %v15 = vld [vmem:[%s0] sm:$0xf]
  %v16 = vld [vmem:[%s1] sm:$0xf]
  %v17 = vld [vmem:[%s1 + $0x4] sm:$0xf]
  %v18 = vld [vmem:[%s1 + $0x8] sm:$0xf]
  %v19 = vld [vmem:[%s1 + $0xc] sm:$0xf]
  %v20 = vld [vmem:[%s1 + $0x10] sm:$0xf]
  %v21 = vld [vmem:[%s1 + $0x14] sm:$0xf]
  %v22 = vld [vmem:[%s1 + $0x18] sm:$0xf]
  %v23 = vld [vmem:[%s1 + $0x1c] sm:$0xf]
  %v24 = vld [vmem:[%s1 + $0x20] sm:$0xf]
  %v25 = vld [vmem:[%s2] sm:$0x1]
  %v27 = vlaneseq
  %v28 = vshrl.u32 %v27, 7
  %v29 = vsub.s32 0, %v28
  %v30 = vrot.slane %v25, %v29
  %v41 = vunpack.c.l.b16 %v16
  %v42 = vunpack.c.l.b16 %v17
  %v43 = vunpack.c.l.b16 %v18
  %v44 = vunpack.c.l.b16 %v19
  %v45 = vunpack.c.l.b16 %v20
  %v46 = vunpack.c.l.b16 %v21
  %v47 = vunpack.c.l.b16 %v22
  %v48 = vunpack.c.l.b16 %v23
  %v49 = vunpack.c.l.b16 %v24
  %v50 = vpack.c.b16 %v42, %v41
  %v51 = vpack.c.b16 %v44, %v43
  %v52 = vpack.c.b16 %v46, %v45
  %v53 = vpack.c.b16 %v48, %v47
  %v54 = vpack.c.b16 %v49, %v49
  %vm59 = vcmask 588800
  %v61 = vsel %vm59, %v15, 0
  %vm63 = vcmask 1043456
  %v65 = vsel %vm63, %v54, 0
  %67 = vmatprep.subr.bf16.mxu0 0
  %68 = vmatpush1.bf16.msra.mxu0 0
  %69 = vmatprep.subr.bf16.mxu0 0
  %70 = vmatpush1.bf16.msra.mxu0 0
  %71 = vmatprep.subr.bf16.mxu0 0
  %72 = vmatpush1.bf16.msra.mxu0 0
  %73 = vmatprep.subr.bf16.mxu0 0
  %74 = vmatpush1.bf16.msra.mxu0 %v65
  %75 = vmatprep.subr.bf16.mxu0 0
  %76 = vmatpush1.bf16.msra.mxu0 %v53
  %77 = vmatprep.subr.bf16.mxu0 0
  %78 = vmatpush1.bf16.msra.mxu0 %v52
  %79 = vmatprep.subr.bf16.mxu0 0
  %80 = vmatpush1.bf16.msra.mxu0 %v51
  %81 = vmatprep.subr.bf16.mxu0 0
  %82 = vmatpush1.bf16.msra.mxu0 %v50
  %83 = vmatprep.subr.bf16.mxu0 0
  %84 = vmatpush2.bf16.msra.mxu0 0
  %85 = vmatprep.subr.bf16.mxu0 0
  %86 = vmatpush2.bf16.msra.mxu0 0
  %87 = vmatprep.subr.bf16.mxu0 0
  %88 = vmatpush2.bf16.msra.mxu0 0
  %89 = vmatprep.subr.bf16.mxu0 0
  %90 = vmatpush2.bf16.msra.mxu0 0
  %91 = vmatprep.subr.bf16.mxu0 0
  %92 = vmatpush2.bf16.msra.mxu0 0
  %93 = vmatprep.subr.bf16.mxu0 0
  %94 = vmatpush2.bf16.msra.mxu0 0
  %95 = vmatprep.subr.bf16.mxu0 0
  %96 = vmatpush2.bf16.msra.mxu0 0
  %97 = vmatprep.subr.bf16.mxu0 0
  %98 = vmatpush2.bf16.msra.mxu0 0
  %99 = vmatprep.mubr.bf16.mxu0 0
  %100 = vmatmul.mubr.bf16.gmra.mxu0 %v61
  %v101 = vpop.f32.mrf.mxu0
  %v102 = vadd.f32 %v30, %v101
  %v103 = vpop.f32.mrf.mxu0
  %v104 = vpop.f32.mrf.mxu0
  %v105 = vpop.f32.mrf.mxu0
  %106 = vdwg.mxu0
  %v107 = vmax.f32 %v102, 0.0
  %vm108 = vcmask 130048
  %109 = vst.msk [vmem:[%s3] sm:$0xff] %vm108, %v107
  // Predicated region
  $region14: #{forward.6} parent=0 // pred_check
    _
  $region15: #{forward.6} parent=0 // pred_check_branch
    %111 = sbr.rel (0) target = $region17
  $region16: #{forward.6} parent=0 // pred_region
    _
  $region17: #{forward.6} parent=0 // pred_fallthru
    _
  // Predicated region
  $region18: #{forward.6} parent=0 // pred_check
    _
  $region19: #{forward.6} parent=0 // pred_check_branch
    %113 = sbr.rel (0) target = $region21
  $region20: #{forward.6} parent=0 // pred_region
    _
  $region21: #{forward.6} parent=0 // pred_fallthru
    _

</llo_original>
